<compile_context>
chip_gen: v5e
topology: v5e:2x2
jax: 0.10.0
libtpu: 0.0.40
codegen_flags: <defaults>
</compile_context>

<pallas_src>
import math
import jax
import jax.numpy as jnp
from jax.experimental import pallas as pl
from jax.experimental.pallas import tpu as pltpu

_INV_SQRT2 = 1.0 / math.sqrt(2.0)


def _round_up(a, b):
    return ((a + b - 1) // b) * b


def _gelu_exact_f32(h):
    # matches torch.nn.functional.gelu default (erf form), computed in f32
    return 0.5 * h * (1.0 + jax.lax.erf(h * _INV_SQRT2))


# ----------------------------- kernels ------------------------------------ #

def _ffn_resident_kernel(x_ref, w1_ref, b1_ref, w2_ref, b2_ref, o_ref):
    # x_ref: (TM, Dp) row tile; weights are fully resident in VMEM.
    x = x_ref[...].astype(jnp.bfloat16)
    h = jnp.dot(x, w1_ref[...], preferred_element_type=jnp.float32) + b1_ref[...]
    h = _gelu_exact_f32(h)
    y = jnp.dot(h.astype(jnp.bfloat16), w2_ref[...],
                preferred_element_type=jnp.float32)
    o_ref[...] = (y + b2_ref[...]).astype(o_ref.dtype)


def _ffn_dff_tiled_kernel(x_ref, w1_ref, b1_ref, w2_ref, b2_ref, o_ref, acc_ref):
    # grid = (rows, Dff chunks); reduction over the hidden (4*d) dimension.
    k = pl.program_id(1)

    @pl.when(k == 0)
    def _():
        acc_ref[...] = jnp.zeros_like(acc_ref)

    x = x_ref[...].astype(jnp.bfloat16)
    h = jnp.dot(x, w1_ref[...], preferred_element_type=jnp.float32) + b1_ref[...]
    h = _gelu_exact_f32(h)
    acc_ref[...] += jnp.dot(h.astype(jnp.bfloat16), w2_ref[...],
                            preferred_element_type=jnp.float32)

    @pl.when(k == pl.num_programs(1) - 1)
    def _():
        o_ref[...] = (acc_ref[...] + b2_ref[...]).astype(o_ref.dtype)


# ----------------------------- wrapper ------------------------------------ #

def poswise_ffn(x, w1, b1, w2, b2, *, tm=512, tkff=512,
                resident_vmem_budget=48 << 20, force_dff_tiling=False):
    """x: (batch, seq, d_hidn) -> (batch, seq, d_hidn).

    w1: (d_hidn, 4*d_hidn), b1: (1, 4*d_hidn) or (4*d_hidn,)
    w2: (4*d_hidn, d_hidn), b2: (1, d_hidn)   or (d_hidn,)
    """
    B, S, D = x.shape
    Din, Dff = w1.shape
    assert Din == D and w2.shape == (Dff, D)

    out_dtype = x.dtype
    M = B * S

    # ---- tile sizes: rows multiple of 8, lane dims padded to 128 ---------- #
    tm = _round_up(max(int(tm), 8), 8)
    tm_eff = min(tm, _round_up(M, 8))
    Mp = _round_up(M, tm_eff)
    Dp = _round_up(D, 128)
    Dff128 = _round_up(Dff, 128)

    xbytes = jnp.dtype(x.dtype).itemsize
    obytes = jnp.dtype(out_dtype).itemsize

    # Conservative resident-weight VMEM estimate (worst case: compiler still
    # double-buffers the constant weight blocks).
    weight_bytes = 2 * ((Dp * Dff128 + Dff128 * Dp) * 2 + (Dff128 + Dp) * 4)
    act_bytes = 2 * tm_eff * Dp * xbytes + 2 * tm_eff * Dp * obytes
    inter_bytes = 2 * tm_eff * Dff128 * 4
    resident_est = weight_bytes + act_bytes + inter_bytes

    use_tiled = force_dff_tiling or (resident_est > resident_vmem_budget)

    if use_tiled:
        tkff_eff = min(_round_up(max(int(tkff), 128), 128), Dff128)
        Dffp = _round_up(Dff, tkff_eff)
    else:
        tkff_eff = Dff128
        Dffp = Dff128

    tiled_weight_bytes = 2 * ((Dp * tkff_eff + tkff_eff * Dp) * 2
                              + (tkff_eff + Dp) * 4)
    tiled_est = (tiled_weight_bytes + act_bytes
                 + 2 * tm_eff * tkff_eff * 4 + tm_eff * Dp * 4)
    est = tiled_est if use_tiled else resident_est
    vmem_limit = int(min(64 << 20, max(32 << 20, est + (8 << 20))))

    # ---- pad & cast operands (zero padding is exact: gelu(0)=0) ----------- #
    x2 = x.reshape(M, D)
    if (Mp, Dp) != (M, D):
        x2 = jnp.pad(x2, ((0, Mp - M), (0, Dp - D)))
    w1b = jnp.pad(w1.astype(jnp.bfloat16), ((0, Dp - D), (0, Dffp - Dff)))
    b1f = jnp.pad(b1.astype(jnp.float32).reshape(1, Dff),
                  ((0, 0), (0, Dffp - Dff)))
    w2b = jnp.pad(w2.astype(jnp.bfloat16), ((0, Dffp - Dff), (0, Dp - D)))
    b2f = jnp.pad(b2.astype(jnp.float32).reshape(1, D), ((0, 0), (0, Dp - D)))

    cost = pl.CostEstimate(
        flops=4 * Mp * Dp * Dffp,               # two matmuls: 2*M*K*N each
        transcendentals=Mp * Dffp,              # erf over hidden activations
        bytes_accessed=(x2.size * xbytes + w1b.size * 2 + w2b.size * 2
                        + b1f.size * 4 + b2f.size * 4 + Mp * Dp * obytes),
    )

    out_shape = jax.ShapeDtypeStruct((Mp, Dp), out_dtype)
    n_m = Mp // tm_eff

    def run(use_buffered):
        # Buffered(1): do not double-buffer grid-invariant blocks.
        wkw = {"pipeline_mode": pl.Buffered(1)} if use_buffered else {}
        if use_tiled:
            n_k = Dffp // tkff_eff
            in_specs = [
                pl.BlockSpec((tm_eff, Dp), lambda i, k: (i, 0)),
                pl.BlockSpec((Dp, tkff_eff), lambda i, k: (0, k)),
                pl.BlockSpec((1, tkff_eff), lambda i, k: (0, k)),
                pl.BlockSpec((tkff_eff, Dp), lambda i, k: (k, 0)),
                pl.BlockSpec((1, Dp), lambda i, k: (0, 0), **wkw),
            ]
            return pl.pallas_call(
                _ffn_dff_tiled_kernel,
                out_shape=out_shape,
                grid=(n_m, n_k),
                in_specs=in_specs,
                out_specs=pl.BlockSpec((tm_eff, Dp), lambda i, k: (i, 0)),
                scratch_shapes=[pltpu.VMEM((tm_eff, Dp), jnp.float32)],
                compiler_params=pltpu.CompilerParams(
                    dimension_semantics=("parallel", "arbitrary"),
                    vmem_limit_bytes=vmem_limit),
                cost_estimate=cost,
            )(x2, w1b, b1f, w2b, b2f)
        else:
            in_specs = [
                pl.BlockSpec((tm_eff, Dp), lambda i: (i, 0)),
                pl.BlockSpec((Dp, Dffp), lambda i: (0, 0), **wkw),
                pl.BlockSpec((1, Dffp), lambda i: (0, 0), **wkw),
                pl.BlockSpec((Dffp, Dp), lambda i: (0, 0), **wkw),
                pl.BlockSpec((1, Dp), lambda i: (0, 0), **wkw),
            ]
            return pl.pallas_call(
                _ffn_resident_kernel,
                out_shape=out_shape,
                grid=(n_m,),
                in_specs=in_specs,
                out_specs=pl.BlockSpec((tm_eff, Dp), lambda i: (i, 0)),
                compiler_params=pltpu.CompilerParams(
                    dimension_semantics=("parallel",),
                    vmem_limit_bytes=vmem_limit),
                cost_estimate=cost,
            )(x2, w1b, b1f, w2b, b2f)

    try:
        out = run(use_buffered=True)
    except Exception:
        # pipeline_mode / Buffered(1) not supported by this jax build:
        # fall back to default (double-buffered) resident blocks.
        out = run(use_buffered=False)

    return out[:M, :D].reshape(B, S, D)


# ----------------------------- params & demo ------------------------------ #

def init_params(key, d_hidn):
    """Init mirroring nn.Conv1d(kernel_size=1) shapes (weights pre-transposed).

    PyTorch conv1 weight: (4*d, d, 1) -> stored as (d, 4*d).
    PyTorch conv2 weight: (d, 4*d, 1) -> stored as (4*d, d).
    """
    d_ff = d_hidn * 4
    k1, k2, k3, k4 = jax.random.split(key, 4)
    bound1 = 1.0 / math.sqrt(d_hidn)   # fan_in = d_hidn * kernel_size(=1)
    bound2 = 1.0 / math.sqrt(d_ff)
    w1 = jax.random.uniform(k1, (d_hidn, d_ff), jnp.float32, -bound1, bound1)
    b1 = jax.random.uniform(k2, (1, d_ff), jnp.float32, -bound1, bound1)
    w2 = jax.random.uniform(k3, (d_ff, d_hidn), jnp.float32, -bound2, bound2)
    b2 = jax.random.uniform(k4, (1, d_hidn), jnp.float32, -bound2, bound2)
    return w1, b1, w2, b2


if __name__ == "__main__":
    batch, seq, d_hidn = 2, 8, 128   # d_hidn=128 as in the reference module

    key = jax.random.PRNGKey(0)
    kx, kp = jax.random.split(key)
    x = jax.random.normal(kx, (batch, seq, d_hidn), dtype=jnp.float32)
    w1, b1, w2, b2 = init_params(kp, d_hidn)

    # reference in plain JAX (f32, exact erf GELU)
    h_ref = x.reshape(-1, d_hidn) @ w1 + b1
    h_ref = 0.5 * h_ref * (1.0 + jax.lax.erf(h_ref / math.sqrt(2.0)))
    ref = (h_ref @ w2 + b2).reshape(batch, seq, d_hidn)

    # resident-weight path (default)
    out = poswise_ffn(x, w1, b1, w2, b2)
    jax.block_until_ready(out)
    assert jnp.allclose(out, ref, atol=5e-2, rtol=5e-2), "resident path mismatch"

    # Dff-tiled reduction path (exercised explicitly for coverage)
    out_t = poswise_ffn(x, w1, b1, w2, b2, force_dff_tiling=True, tkff=256)
    jax.block_until_ready(out_t)
    assert jnp.allclose(out_t, ref, atol=5e-2, rtol=5e-2), "Dff-tiled path mismatch"

    print("KERNEL_OK")
</pallas_src>

<mosaic_0001>
module attributes {stable_mosaic.version = 11 : i64} {
  func.func @_ffn_resident_kernel(%arg0: i32, %arg1: memref<16x128xf32, #tpu.memory_space<vmem>>, %arg2: memref<128x512xbf16, #tpu.memory_space<vmem>>, %arg3: memref<1x512xf32, #tpu.memory_space<vmem>>, %arg4: memref<512x128xbf16, #tpu.memory_space<vmem>>, %arg5: memref<1x128xf32, #tpu.memory_space<vmem>>, %arg6: memref<16x128xf32, #tpu.memory_space<vmem>>) attributes {dimension_semantics = [#tpu.dimension_semantics<parallel>], iteration_bounds = array<i64: 1>, scalar_prefetch = 0 : i64, scratch_operands = 0 : i64, tpu.core_type = #tpu.core_type<tc>, window_params = [{transform_indices = @transform_0, window_bounds = array<i64: 16, 128>}, {pipeline_mode = #tpu.pipeline_mode<synchronous>, transform_indices = @transform_1, window_bounds = array<i64: 128, 512>}, {pipeline_mode = #tpu.pipeline_mode<synchronous>, transform_indices = @transform_2, window_bounds = array<i64: 1, 512>}, {pipeline_mode = #tpu.pipeline_mode<synchronous>, transform_indices = @transform_3, window_bounds = array<i64: 512, 128>}, {pipeline_mode = #tpu.pipeline_mode<synchronous>, transform_indices = @transform_4, window_bounds = array<i64: 1, 128>}, {transform_indices = @transform_5, window_bounds = array<i64: 16, 128>}]} {
    %c0 = arith.constant 0 : index
    %c0_0 = arith.constant 0 : index
    %0 = vector.load %arg1[%c0, %c0_0] : memref<16x128xf32, #tpu.memory_space<vmem>>, vector<16x128xf32>
    %1 = arith.truncf %0 : vector<16x128xf32> to vector<16x128xbf16>
    %c0_1 = arith.constant 0 : index
    %c0_2 = arith.constant 0 : index
    %2 = vector.load %arg2[%c0_1, %c0_2] : memref<128x512xbf16, #tpu.memory_space<vmem>>, vector<128x512xbf16>
    %cst = arith.constant dense<0.000000e+00> : vector<16x512xf32>
    %3 = tpu.matmul %1, %2, %cst {dimension_numbers = #tpu.dot_dimension_numbers<[1], [0], [0], [1], [0, 0, 1, 1], [], []>} : vector<16x128xbf16>, vector<128x512xbf16>, vector<16x512xf32> -> vector<16x512xf32>
    %c0_3 = arith.constant 0 : index
    %c0_4 = arith.constant 0 : index
    %4 = vector.load %arg3[%c0_3, %c0_4] : memref<1x512xf32, #tpu.memory_space<vmem>>, vector<1x512xf32>
    %5 = vector.broadcast %4 : vector<1x512xf32> to vector<16x512xf32>
    %6 = arith.addf %3, %5 : vector<16x512xf32>
    %cst_5 = arith.constant 5.000000e-01 : f32
    %7 = vector.broadcast %cst_5 : f32 to vector<16x512xf32>
    %8 = arith.mulf %7, %6 : vector<16x512xf32>
    %cst_6 = arith.constant 0.707106769 : f32
    %9 = vector.broadcast %cst_6 : f32 to vector<16x512xf32>
    %10 = arith.mulf %6, %9 : vector<16x512xf32>
    %11 = math.erf %10 : vector<16x512xf32>
    %cst_7 = arith.constant 1.000000e+00 : f32
    %12 = vector.broadcast %cst_7 : f32 to vector<16x512xf32>
    %13 = arith.addf %12, %11 : vector<16x512xf32>
    %14 = arith.mulf %8, %13 : vector<16x512xf32>
    %15 = arith.truncf %14 : vector<16x512xf32> to vector<16x512xbf16>
    %c0_8 = arith.constant 0 : index
    %c0_9 = arith.constant 0 : index
    %16 = vector.load %arg4[%c0_8, %c0_9] : memref<512x128xbf16, #tpu.memory_space<vmem>>, vector<512x128xbf16>
    %cst_10 = arith.constant dense<0.000000e+00> : vector<16x128xf32>
    %17 = tpu.matmul %15, %16, %cst_10 {dimension_numbers = #tpu.dot_dimension_numbers<[1], [0], [0], [1], [0, 0, 1, 1], [], []>} : vector<16x512xbf16>, vector<512x128xbf16>, vector<16x128xf32> -> vector<16x128xf32>
    %c0_11 = arith.constant 0 : index
    %c0_12 = arith.constant 0 : index
    %18 = vector.load %arg5[%c0_11, %c0_12] : memref<1x128xf32, #tpu.memory_space<vmem>>, vector<1x128xf32>
    %19 = vector.broadcast %18 : vector<1x128xf32> to vector<16x128xf32>
    %20 = arith.addf %17, %19 : vector<16x128xf32>
    %c0_13 = arith.constant 0 : index
    %c0_14 = arith.constant 0 : index
    %21 = vector.load %arg6[%c0_13, %c0_14] : memref<16x128xf32, #tpu.memory_space<vmem>>, vector<16x128xf32>
    tpu.vector_store %arg6[%c0_13, %c0_14], %20 {strides = array<i32>} : memref<16x128xf32, #tpu.memory_space<vmem>>, vector<16x128xf32>,
    return
  }
  func.func @transform_0(%arg0: i32) -> (i32, i32) {
    %c0_i32 = arith.constant 0 : i32
    %c0_i32_0 = arith.constant 0 : i32
    return %arg0, %c0_i32 : i32, i32
  }
  func.func @transform_1(%arg0: i32) -> (i32, i32) {
    %c0_i32 = arith.constant 0 : i32
    %c0_i32_0 = arith.constant 0 : i32
    %c0_i32_1 = arith.constant 0 : i32
    return %c0_i32, %c0_i32_0 : i32, i32
  }
  func.func @transform_2(%arg0: i32) -> (i32, i32) {
    %c0_i32 = arith.constant 0 : i32
    %c0_i32_0 = arith.constant 0 : i32
    %c0_i32_1 = arith.constant 0 : i32
    return %c0_i32, %c0_i32_0 : i32, i32
  }
  func.func @transform_3(%arg0: i32) -> (i32, i32) {
    %c0_i32 = arith.constant 0 : i32
    %c0_i32_0 = arith.constant 0 : i32
    %c0_i32_1 = arith.constant 0 : i32
    return %c0_i32, %c0_i32_0 : i32, i32
  }
  func.func @transform_4(%arg0: i32) -> (i32, i32) {
    %c0_i32 = arith.constant 0 : i32
    %c0_i32_0 = arith.constant 0 : i32
    %c0_i32_1 = arith.constant 0 : i32
    return %c0_i32, %c0_i32_0 : i32, i32
  }
  func.func @transform_5(%arg0: i32) -> (i32, i32) {
    %c0_i32 = arith.constant 0 : i32
    %c0_i32_0 = arith.constant 0 : i32
    return %arg0, %c0_i32 : i32, i32
  }
}

module attributes {stable_mosaic.version = 11 : i64} {
  func.func @_ffn_resident_kernel(%arg0: i32, %arg1: memref<16x128xf32, #tpu.memory_space<vmem>>, %arg2: memref<128x512xbf16, #tpu.memory_space<vmem>>, %arg3: memref<1x512xf32, #tpu.memory_space<vmem>>, %arg4: memref<512x128xbf16, #tpu.memory_space<vmem>>, %arg5: memref<1x128xf32, #tpu.memory_space<vmem>>, %arg6: memref<16x128xf32, #tpu.memory_space<vmem>>) attributes {dimension_semantics = [#tpu.dimension_semantics<parallel>], iteration_bounds = array<i64: 1>, scalar_prefetch = 0 : i64, scratch_operands = 0 : i64, tpu.core_type = #tpu.core_type<tc>, window_params = [{transform_indices = @transform_0, window_bounds = array<i64: 16, 128>}, {pipeline_mode = #tpu.pipeline_mode<synchronous>, transform_indices = @transform_1, window_bounds = array<i64: 128, 512>}, {pipeline_mode = #tpu.pipeline_mode<synchronous>, transform_indices = @transform_2, window_bounds = array<i64: 1, 512>}, {pipeline_mode = #tpu.pipeline_mode<synchronous>, transform_indices = @transform_3, window_bounds = array<i64: 512, 128>}, {pipeline_mode = #tpu.pipeline_mode<synchronous>, transform_indices = @transform_4, window_bounds = array<i64: 1, 128>}, {transform_indices = @transform_5, window_bounds = array<i64: 16, 128>}]} {
    %c0 = arith.constant 0 : index
    %c0_0 = arith.constant 0 : index
    %0 = vector.load %arg1[%c0, %c0_0] : memref<16x128xf32, #tpu.memory_space<vmem>>, vector<16x128xf32>
    %1 = arith.truncf %0 : vector<16x128xf32> to vector<16x128xbf16>
    %c0_1 = arith.constant 0 : index
    %c0_2 = arith.constant 0 : index
    %2 = vector.load %arg2[%c0_1, %c0_2] : memref<128x512xbf16, #tpu.memory_space<vmem>>, vector<128x512xbf16>
    %cst = arith.constant dense<0.000000e+00> : vector<16x512xf32>
    %3 = tpu.matmul %1, %2, %cst {dimension_numbers = #tpu.dot_dimension_numbers<[1], [0], [0], [1], [0, 0, 1, 1], [], []>} : vector<16x128xbf16>, vector<128x512xbf16>, vector<16x512xf32> -> vector<16x512xf32>
    %c0_3 = arith.constant 0 : index
    %c0_4 = arith.constant 0 : index
    %4 = vector.load %arg3[%c0_3, %c0_4] : memref<1x512xf32, #tpu.memory_space<vmem>>, vector<1x512xf32>
    %5 = vector.broadcast %4 : vector<1x512xf32> to vector<16x512xf32>
    %6 = arith.addf %3, %5 : vector<16x512xf32>
    %cst_5 = arith.constant 5.000000e-01 : f32
    %7 = vector.broadcast %cst_5 : f32 to vector<16x512xf32>
    %8 = arith.mulf %7, %6 : vector<16x512xf32>
    %cst_6 = arith.constant 0.707106769 : f32
    %9 = vector.broadcast %cst_6 : f32 to vector<16x512xf32>
    %10 = arith.mulf %6, %9 : vector<16x512xf32>
    %11 = math.erf %10 : vector<16x512xf32>
    %cst_7 = arith.constant 1.000000e+00 : f32
    %12 = vector.broadcast %cst_7 : f32 to vector<16x512xf32>
    %13 = arith.addf %12, %11 : vector<16x512xf32>
    %14 = arith.mulf %8, %13 : vector<16x512xf32>
    %15 = arith.truncf %14 : vector<16x512xf32> to vector<16x512xbf16>
    %c0_8 = arith.constant 0 : index
    %c0_9 = arith.constant 0 : index
    %16 = vector.load %arg4[%c0_8, %c0_9] : memref<512x128xbf16, #tpu.memory_space<vmem>>, vector<512x128xbf16>
    %cst_10 = arith.constant dense<0.000000e+00> : vector<16x128xf32>
    %17 = tpu.matmul %15, %16, %cst_10 {dimension_numbers = #tpu.dot_dimension_numbers<[1], [0], [0], [1], [0, 0, 1, 1], [], []>} : vector<16x512xbf16>, vector<512x128xbf16>, vector<16x128xf32> -> vector<16x128xf32>
    %c0_11 = arith.constant 0 : index
    %c0_12 = arith.constant 0 : index
    %18 = vector.load %arg5[%c0_11, %c0_12] : memref<1x128xf32, #tpu.memory_space<vmem>>, vector<1x128xf32>
    %19 = vector.broadcast %18 : vector<1x128xf32> to vector<16x128xf32>
    %20 = arith.addf %17, %19 : vector<16x128xf32>
    %c0_13 = arith.constant 0 : index
    %c0_14 = arith.constant 0 : index
    %21 = vector.load %arg6[%c0_13, %c0_14] : memref<16x128xf32, #tpu.memory_space<vmem>>, vector<16x128xf32>
    tpu.vector_store %arg6[%c0_13, %c0_14], %20 {strides = array<i32>} : memref<16x128xf32, #tpu.memory_space<vmem>>, vector<16x128xf32>,
    return
  }
  func.func @transform_0(%arg0: i32) -> (i32, i32) {
    %c0_i32 = arith.constant 0 : i32
    %c0_i32_0 = arith.constant 0 : i32
    return %arg0, %c0_i32 : i32, i32
  }
  func.func @transform_1(%arg0: i32) -> (i32, i32) {
    %c0_i32 = arith.constant 0 : i32
    %c0_i32_0 = arith.constant 0 : i32
    %c0_i32_1 = arith.constant 0 : i32
    return %c0_i32, %c0_i32_0 : i32, i32
  }
  func.func @transform_2(%arg0: i32) -> (i32, i32) {
    %c0_i32 = arith.constant 0 : i32
    %c0_i32_0 = arith.constant 0 : i32
    %c0_i32_1 = arith.constant 0 : i32
    return %c0_i32, %c0_i32_0 : i32, i32
  }
  func.func @transform_3(%arg0: i32) -> (i32, i32) {
    %c0_i32 = arith.constant 0 : i32
    %c0_i32_0 = arith.constant 0 : i32
    %c0_i32_1 = arith.constant 0 : i32
    return %c0_i32, %c0_i32_0 : i32, i32
  }
  func.func @transform_4(%arg0: i32) -> (i32, i32) {
    %c0_i32 = arith.constant 0 : i32
    %c0_i32_0 = arith.constant 0 : i32
    %c0_i32_1 = arith.constant 0 : i32
    return %c0_i32, %c0_i32_0 : i32, i32
  }
  func.func @transform_5(%arg0: i32) -> (i32, i32) {
    %c0_i32 = arith.constant 0 : i32
    %c0_i32_0 = arith.constant 0 : i32
    return %arg0, %c0_i32 : i32, i32
  }
}

</mosaic_0001>

<llo_original>
// kernel: tpu_custom_call.1
$region0: #{tpu_custom_call.1}
  #allocation0 [shape = 'u32[]', space=smem, size = 0x4, offset = 0x4, fixed_abs, tag = 'smem constant byte address 0x4 - core index']
  #allocation1 [shape = 'u32[72,128]{1,0:T(1,128)}', space=vmem, size = 0x9000, scoped, tag = 'internal scratch']
  %s0 = inlined_call_operand.hbm [shape: f32[16,128], index: 0, kind: input, shape index: {}]
  %s1 = inlined_call_operand.hbm [shape: bf16[128,512], index: 1, kind: input, shape index: {}]
  %s2 = inlined_call_operand.hbm [shape: f32[1,512], index: 2, kind: input, shape index: {}]
  %s3 = inlined_call_operand.hbm [shape: bf16[512,128], index: 3, kind: input, shape index: {}]
  %s4 = inlined_call_operand.vmem [shape: f32[1,128], index: 4, kind: input, shape index: {}]
  %s5 = inlined_call_operand.hbm [shape: f32[16,128], index: 5, kind: output, shape index: {}]
  %s6 = sld [smem:[#allocation0]]
  $region46: #{tpu_custom_call.1} parent=0
    _
  %s8 = ssub.s32 1, %s6
  %s9 = scalar_select 0, %s8, %s6
  $region1: #{tpu_custom_call.1} parent=0
    #allocation2 [shape = 'u8[8192]{0}', space=vmem, size = 0x2000, scoped, tag = 'input window, operand 0, single buffered']
    #allocation3 [shape = 's32[1]{0}', space=sflag, size = 0x4, scoped, tag = 'scoped memory for tpu_custom_call.1']
    #allocation4 [shape = 's32[1]{0}', space=sflag, size = 0x4, scoped, tag = 'scoped memory for tpu_custom_call.1']
    #allocation5 [shape = 'u8[131072]{0}', space=vmem, size = 0x20000, scoped, tag = 'input window, operand 1, single buffered']
    #allocation6 [shape = 's32[1]{0}', space=sflag, size = 0x4, scoped, tag = 'scoped memory for tpu_custom_call.1']
    #allocation7 [shape = 'u8[2048]{0}', space=vmem, size = 0x800, scoped, tag = 'input window, operand 2, single buffered']
    #allocation8 [shape = 'u8[131072]{0}', space=vmem, size = 0x20000, scoped, tag = 'input window, operand 3, single buffered']
    #allocation9 [shape = 's32[1]{0}', space=sflag, size = 0x4, scoped, tag = 'scoped memory for tpu_custom_call.1']
    #allocation10 [shape = 'u8[8192]{0}', space=vmem, size = 0x2000, scoped, tag = 'output window, operand 0, single buffered']
    %10 = vsyncpa [#allocation3], 0
    %11 = vsyncpa [#allocation6], 0
    %12 = vsyncpa [#allocation9], 0
    %13 = vsyncpa [#allocation4], 0
    // Predicated region
    $region2: #{tpu_custom_call.1} parent=1 // pred_check
      _
    $region3: #{tpu_custom_call.1} parent=1 // pred_check_branch
      %15 = sbr.rel (0) target = $region5
    $region4: #{tpu_custom_call.1} parent=1 // pred_region
      %17 = vsyncadd [#allocation3], 0
      %s18 = sshll.u32 %s0, 4
      %s19 = int_to_ptr.hbm [resolvable:$true] %s18
      %s20 = sshll.u32 [#allocation2], 4
      %s21 = int_to_ptr.vmem [resolvable:$true] %s20
      %26 = dma.hbm_to_vmem [thread:$0]  %s19, 256, %s21, [#allocation3], 128, 128, 8
    $region5: #{tpu_custom_call.1} parent=1 // pred_fallthru
      _
    // Predicated region
    $region6: #{tpu_custom_call.1} parent=1 // pred_check
      _
    $region7: #{tpu_custom_call.1} parent=1 // pred_check_branch
      %28 = sbr.rel (0) target = $region9
    $region8: #{tpu_custom_call.1} parent=1 // pred_region
      %30 = vsyncadd [#allocation6], 0
      %s31 = sshll.u32 %s1, 4
      %s32 = int_to_ptr.hbm [resolvable:$true] %s31
      %s33 = sshll.u32 [#allocation5], 4
      %s34 = int_to_ptr.vmem [resolvable:$true] %s33
      %39 = dma.hbm_to_vmem [thread:$0]  %s32, 4096, %s34, [#allocation6], 256, 256, 16
    $region9: #{tpu_custom_call.1} parent=1 // pred_fallthru
      _
    // Predicated region
    $region10: #{tpu_custom_call.1} parent=1 // pred_check
      _
    $region11: #{tpu_custom_call.1} parent=1 // pred_check_branch
      %41 = sbr.rel (0) target = $region13
    $region12: #{tpu_custom_call.1} parent=1 // pred_region
      %43 = vsyncadd [#allocation6], 0
      %s45 = sshll.u32 %s2, 4
      %s46 = int_to_ptr.hbm [resolvable:$true] %s45
      %s47 = sshll.u32 [#allocation7], 4
      %s48 = int_to_ptr.vmem [resolvable:$true] %s47
      %50 = dma.hbm_to_vmem [thread:$0]  %s46, 64, %s48, [#allocation6]
    $region13: #{tpu_custom_call.1} parent=1 // pred_fallthru
      _
    // Predicated region
    $region14: #{tpu_custom_call.1} parent=1 // pred_check
      _
    $region15: #{tpu_custom_call.1} parent=1 // pred_check_branch
      %52 = sbr.rel (0) target = $region17
    $region16: #{tpu_custom_call.1} parent=1 // pred_region
      %54 = vsyncadd [#allocation9], 0
      %s55 = sshll.u32 %s3, 4
      %s56 = int_to_ptr.hbm [resolvable:$true] %s55
      %s57 = sshll.u32 [#allocation8], 4
      %s58 = int_to_ptr.vmem [resolvable:$true] %s57
      %63 = dma.hbm_to_vmem [thread:$0]  %s56, 4096, %s58, [#allocation9], 64, 64, 4
    $region17: #{tpu_custom_call.1} parent=1 // pred_fallthru
      _
    // Predicated region
    $region18: #{tpu_custom_call.1} parent=1 // pred_check
      _
    $region19: #{tpu_custom_call.1} parent=1 // pred_check_branch
      %65 = sbr.rel (0) target = $region21
    $region20: #{tpu_custom_call.1} parent=1 // pred_region
      _
    $region21: #{tpu_custom_call.1} parent=1 // pred_fallthru
      _
    // Predicated region
    $region22: #{tpu_custom_call.1} parent=1 // pred_check
      _
    $region23: #{tpu_custom_call.1} parent=1 // pred_check_branch
      %67 = sbr.rel (0) target = $region25
    $region24: #{tpu_custom_call.1} parent=1 // pred_region
      %69 = dma.done [#allocation3], 256
    $region25: #{tpu_custom_call.1} parent=1 // pred_fallthru
      _
    // Predicated region
    $region26: #{tpu_custom_call.1} parent=1 // pred_check
      _
    $region27: #{tpu_custom_call.1} parent=1 // pred_check_branch
      %71 = sbr.rel (0) target = $region29
    $region28: #{tpu_custom_call.1} parent=1 // pred_region
      %73 = dma.done [#allocation6], 4096
    $region29: #{tpu_custom_call.1} parent=1 // pred_fallthru
      _
    // Predicated region
    $region30: #{tpu_custom_call.1} parent=1 // pred_check
      _
    $region31: #{tpu_custom_call.1} parent=1 // pred_check_branch
      %75 = sbr.rel (0) target = $region33
    $region32: #{tpu_custom_call.1} parent=1 // pred_region
      %77 = dma.done [#allocation6], 64
    $region33: #{tpu_custom_call.1} parent=1 // pred_fallthru
      _
    // Predicated region
    $region34: #{tpu_custom_call.1} parent=1 // pred_check
      _
    $region35: #{tpu_custom_call.1} parent=1 // pred_check_branch
      %79 = sbr.rel (0) target = $region37
    $region36: #{tpu_custom_call.1} parent=1 // pred_region
      %81 = dma.done [#allocation9], 4096
    $region37: #{tpu_custom_call.1} parent=1 // pred_fallthru
      _
    %v82 = vld [vmem:[#allocation2] sm:$0xff]
    %v83 = vld [vmem:[#allocation2 + $0x8] sm:$0xff]
    %v84 = vpack.c.bf16 %v83, %v82
    %v85 = vld [vmem:[#allocation5] sm:$0xff]
    %v86 = vld [vmem:[#allocation5 + $0x8] sm:$0xff]
    %v87 = vld [vmem:[#allocation5 + $0x10] sm:$0xff]
    %v88 = vld [vmem:[#allocation5 + $0x18] sm:$0xff]
    %v89 = vld [vmem:[#allocation5 + $0x20] sm:$0xff]
    %v90 = vld [vmem:[#allocation5 + $0x28] sm:$0xff]
    %v91 = vld [vmem:[#allocation5 + $0x30] sm:$0xff]
    %v92 = vld [vmem:[#allocation5 + $0x38] sm:$0xff]
    %v93 = vld [vmem:[#allocation5 + $0x40] sm:$0xff]
    %v94 = vld [vmem:[#allocation5 + $0x48] sm:$0xff]
    %v95 = vld [vmem:[#allocation5 + $0x50] sm:$0xff]
    %v96 = vld [vmem:[#allocation5 + $0x58] sm:$0xff]
    %v97 = vld [vmem:[#allocation5 + $0x60] sm:$0xff]
    %v98 = vld [vmem:[#allocation5 + $0x68] sm:$0xff]
    %v99 = vld [vmem:[#allocation5 + $0x70] sm:$0xff]
    %v100 = vld [vmem:[#allocation5 + $0x78] sm:$0xff]
    %v101 = vld [vmem:[#allocation5 + $0x80] sm:$0xff]
    %v102 = vld [vmem:[#allocation5 + $0x88] sm:$0xff]
    %v103 = vld [vmem:[#allocation5 + $0x90] sm:$0xff]
    %v104 = vld [vmem:[#allocation5 + $0x98] sm:$0xff]
    %v105 = vld [vmem:[#allocation5 + $0xa0] sm:$0xff]
    %v106 = vld [vmem:[#allocation5 + $0xa8] sm:$0xff]
    %v107 = vld [vmem:[#allocation5 + $0xb0] sm:$0xff]
    %v108 = vld [vmem:[#allocation5 + $0xb8] sm:$0xff]
    %v109 = vld [vmem:[#allocation5 + $0xc0] sm:$0xff]
    %v110 = vld [vmem:[#allocation5 + $0xc8] sm:$0xff]
    %v111 = vld [vmem:[#allocation5 + $0xd0] sm:$0xff]
    %v112 = vld [vmem:[#allocation5 + $0xd8] sm:$0xff]
    %v113 = vld [vmem:[#allocation5 + $0xe0] sm:$0xff]
    %v114 = vld [vmem:[#allocation5 + $0xe8] sm:$0xff]
    %v115 = vld [vmem:[#allocation5 + $0xf0] sm:$0xff]
    %v116 = vld [vmem:[#allocation5 + $0xf8] sm:$0xff]
    %v117 = vld [vmem:[#allocation7] sm:$0xf]
    %v119 = vperm.slane %v117, 0
    %v120 = vperm.slane %v117, 1
    %v121 = vperm.slane %v117, 2
    %v122 = vperm.slane %v117, 3
    %v159 = vunpack.c.l.b16 %v85
    %v160 = vunpack.c.h.b16 %v85
    %v161 = vunpack.c.l.b16 %v86
    %v162 = vunpack.c.h.b16 %v86
    %v163 = vunpack.c.l.b16 %v87
    %v164 = vunpack.c.h.b16 %v87
    %v165 = vunpack.c.l.b16 %v88
    %v166 = vunpack.c.h.b16 %v88
    %v167 = vunpack.c.l.b16 %v89
    %v168 = vunpack.c.h.b16 %v89
    %v169 = vunpack.c.l.b16 %v90
    %v170 = vunpack.c.h.b16 %v90
    %v171 = vunpack.c.l.b16 %v91
    %v172 = vunpack.c.h.b16 %v91
    %v173 = vunpack.c.l.b16 %v92
    %v174 = vunpack.c.h.b16 %v92
    %v175 = vunpack.c.l.b16 %v93
    %v176 = vunpack.c.h.b16 %v93
    %v177 = vunpack.c.l.b16 %v94
    %v178 = vunpack.c.h.b16 %v94
    %v179 = vunpack.c.l.b16 %v95
    %v180 = vunpack.c.h.b16 %v95
    %v181 = vunpack.c.l.b16 %v96
    %v182 = vunpack.c.h.b16 %v96
    %v183 = vunpack.c.l.b16 %v97
    %v184 = vunpack.c.h.b16 %v97
    %v185 = vunpack.c.l.b16 %v98
    %v186 = vunpack.c.h.b16 %v98
    %v187 = vunpack.c.l.b16 %v99
    %v188 = vunpack.c.h.b16 %v99
    %v189 = vunpack.c.l.b16 %v100
    %v190 = vunpack.c.h.b16 %v100
    %v191 = vunpack.c.l.b16 %v101
    %v192 = vunpack.c.h.b16 %v101
    %v193 = vunpack.c.l.b16 %v102
    %v194 = vunpack.c.h.b16 %v102
    %v195 = vunpack.c.l.b16 %v103
    %v196 = vunpack.c.h.b16 %v103
    %v197 = vunpack.c.l.b16 %v104
    %v198 = vunpack.c.h.b16 %v104
    %v199 = vunpack.c.l.b16 %v105
    %v200 = vunpack.c.h.b16 %v105
    %v201 = vunpack.c.l.b16 %v106
    %v202 = vunpack.c.h.b16 %v106
    %v203 = vunpack.c.l.b16 %v107
    %v204 = vunpack.c.h.b16 %v107
    %v205 = vunpack.c.l.b16 %v108
    %v206 = vunpack.c.h.b16 %v108
    %v207 = vunpack.c.l.b16 %v109
    %v208 = vunpack.c.h.b16 %v109
    %v209 = vunpack.c.l.b16 %v110
    %v210 = vunpack.c.h.b16 %v110
    %v211 = vunpack.c.l.b16 %v111
    %v212 = vunpack.c.h.b16 %v111
    %v213 = vunpack.c.l.b16 %v112
    %v214 = vunpack.c.h.b16 %v112
    %v215 = vunpack.c.l.b16 %v113
    %v216 = vunpack.c.h.b16 %v113
    %v217 = vunpack.c.l.b16 %v114
    %v218 = vunpack.c.h.b16 %v114
    %v219 = vunpack.c.l.b16 %v115
    %v220 = vunpack.c.h.b16 %v115
    %v221 = vunpack.c.l.b16 %v116
    %v222 = vunpack.c.h.b16 %v116
    %v223 = vpack.c.b16 %v163, %v159
    %v224 = vpack.c.b16 %v164, %v160
    %v225 = vpack.c.b16 %v165, %v161
    %v226 = vpack.c.b16 %v166, %v162
    %v227 = vpack.c.b16 %v171, %v167
    %v228 = vpack.c.b16 %v172, %v168
    %v229 = vpack.c.b16 %v173, %v169
    %v230 = vpack.c.b16 %v174, %v170
    %v231 = vpack.c.b16 %v179, %v175
    %v232 = vpack.c.b16 %v180, %v176
    %v233 = vpack.c.b16 %v181, %v177
    %v234 = vpack.c.b16 %v182, %v178
    %v235 = vpack.c.b16 %v187, %v183
    %v236 = vpack.c.b16 %v188, %v184
    %v237 = vpack.c.b16 %v189, %v185
    %v238 = vpack.c.b16 %v190, %v186
    %v239 = vpack.c.b16 %v195, %v191
    %v240 = vpack.c.b16 %v196, %v192
    %v241 = vpack.c.b16 %v197, %v193
    %v242 = vpack.c.b16 %v198, %v194
    %v243 = vpack.c.b16 %v203, %v199
    %v244 = vpack.c.b16 %v204, %v200
    %v245 = vpack.c.b16 %v205, %v201
    %v246 = vpack.c.b16 %v206, %v202
    %v247 = vpack.c.b16 %v211, %v207
    %v248 = vpack.c.b16 %v212, %v208
    %v249 = vpack.c.b16 %v213, %v209
    %v250 = vpack.c.b16 %v214, %v210
    %v251 = vpack.c.b16 %v219, %v215
    %v252 = vpack.c.b16 %v220, %v216
    %v253 = vpack.c.b16 %v221, %v217
    %v254 = vpack.c.b16 %v222, %v218
    %287 = vmatpush.bf16.msra.mxu0 %v251
    %288 = vmatpush.bf16.msra.mxu0 %v247
    %289 = vmatpush.bf16.msra.mxu0 %v243
    %290 = vmatpush.bf16.msra.mxu0 %v239
    %291 = vmatpush.bf16.msra.mxu0 %v235
    %292 = vmatpush.bf16.msra.mxu0 %v231
    %293 = vmatpush.bf16.msra.mxu0 %v227
    %294 = vmatpush.bf16.msra.mxu0 %v223
    %295 = vmatmul.bf16.gmra.mxu0 %v84
    %v296 = vpop.f32.mrf.mxu0
    %v297 = vadd.f32 %v119, %v296
    %v298 = vpop.f32.mrf.mxu0
    %v299 = vadd.f32 %v119, %v298
    %300 = vdwg.mxu0
    %301 = vmatpush.bf16.msra.mxu0 %v252
    %302 = vmatpush.bf16.msra.mxu0 %v248
    %303 = vmatpush.bf16.msra.mxu0 %v244
    %304 = vmatpush.bf16.msra.mxu0 %v240
    %305 = vmatpush.bf16.msra.mxu0 %v236
    %306 = vmatpush.bf16.msra.mxu0 %v232
    %307 = vmatpush.bf16.msra.mxu0 %v228
    %308 = vmatpush.bf16.msra.mxu0 %v224
    %309 = vmatmul.bf16.gmra.mxu0 %v84
    %v310 = vpop.f32.mrf.mxu0
    %v311 = vadd.f32 %v120, %v310
    %v312 = vpop.f32.mrf.mxu0
    %v313 = vadd.f32 %v120, %v312
    %314 = vdwg.mxu0
    %315 = vmatpush.bf16.msra.mxu0 %v253
    %316 = vmatpush.bf16.msra.mxu0 %v249
    %317 = vmatpush.bf16.msra.mxu0 %v245
    %318 = vmatpush.bf16.msra.mxu0 %v241
    %319 = vmatpush.bf16.msra.mxu0 %v237
    %320 = vmatpush.bf16.msra.mxu0 %v233
    %321 = vmatpush.bf16.msra.mxu0 %v229
    %322 = vmatpush.bf16.msra.mxu0 %v225
    %323 = vmatmul.bf16.gmra.mxu0 %v84
    %v324 = vpop.f32.mrf.mxu0
    %v325 = vadd.f32 %v121, %v324
    %v326 = vpop.f32.mrf.mxu0
    %v327 = vadd.f32 %v121, %v326
    %328 = vdwg.mxu0
    %329 = vmatpush.bf16.msra.mxu0 %v254
    %330 = vmatpush.bf16.msra.mxu0 %v250
    %331 = vmatpush.bf16.msra.mxu0 %v246
    %332 = vmatpush.bf16.msra.mxu0 %v242
    %333 = vmatpush.bf16.msra.mxu0 %v238
    %334 = vmatpush.bf16.msra.mxu0 %v234
    %335 = vmatpush.bf16.msra.mxu0 %v230
    %336 = vmatpush.bf16.msra.mxu0 %v226
    %337 = vmatmul.bf16.gmra.mxu0 %v84
    %v338 = vpop.f32.mrf.mxu0
    %v339 = vadd.f32 %v122, %v338
    %v340 = vpop.f32.mrf.mxu0
    %v341 = vadd.f32 %v122, %v340
    %342 = vdwg.mxu0
    %v343 = vmul.f32 %v297, 0.5
    %v344 = vmul.f32 %v311, 0.5
    %v345 = vmul.f32 %v325, 0.5
    %v346 = vmul.f32 %v339, 0.5
    %v347 = vmul.f32 %v299, 0.5
    %v348 = vmul.f32 %v313, 0.5
    %v349 = vmul.f32 %v327, 0.5
    %v350 = vmul.f32 %v341, 0.5
    %v351 = vmul.f32 %v297, 0.70710677
    %v352 = vmul.f32 %v311, 0.70710677
    %v353 = vmul.f32 %v325, 0.70710677
    %v354 = vmul.f32 %v339, 0.70710677
    %v355 = vmul.f32 %v299, 0.70710677
    %v356 = vmul.f32 %v313, 0.70710677
    %v357 = vmul.f32 %v327, 0.70710677
    %v358 = vmul.f32 %v341, 0.70710677
    %v359 = vmul.f32 %v351, %v351
    %v360 = vmin.f32 16.0, %v359
    %v361 = vmul.f32 %v360, 2.1237322e-06
    %v362 = vadd.f32 %v361, 0.00028619796
    %v363 = vmul.f32 %v360, %v362
    %v364 = vadd.f32 %v363, 0.0036580483
    %v365 = vmul.f32 %v360, %v364
    %v366 = vadd.f32 %v365, 0.05243302
    %v367 = vmul.f32 %v360, %v366
    %v368 = vadd.f32 %v367, 0.18741608
    %v369 = vmul.f32 %v360, %v368
    %v370 = vadd.f32 %v369, 1.1283791
    %v371 = vmul.f32 %v351, %v370
    %v372 = vmul.f32 %v360, 3.8918573e-05
    %v373 = vadd.f32 %v372, 0.001143296
    %v374 = vmul.f32 %v360, %v373
    %v375 = vadd.f32 %v374, 0.014752088
    %v376 = vmul.f32 %v360, %v375
    %v377 = vadd.f32 %v376, 0.112945676
    %v378 = vmul.f32 %v360, %v377
    %v379 = vadd.f32 %v378, 0.4994258
    %v380 = vmul.f32 %v360, %v379
    %v381 = vadd.f32 %v380, 1.0
    %v382 = vrcp.pop %v381
    %v383 = vmul.f32 %v381, %v382
    %v384 = vsub.f32 1.0, %v383
    %v385 = vmul.f32 %v382, %v384
    %v386 = vadd.f32 %v382, %v385
    %vm387 = vweird.f32 %v381
    %vm388 = vweird.f32 %v382
    %vm389 = vmor %vm387, %vm388
    %v390 = vsel %vm389, %v382, %v386
    %v391 = vand.u32 2147483647, %v381
    %vm392 = vcmp.eq.f32.partialorder %v391, 8.507059e+37
    %v393 = vand.u32 %v381, 2147483648
    %v394 = vor.u32 1.1754944e-38, %v393
    %v395 = vsel %vm392, %v394, %v390
    %v396 = vmul.f32 %v371, %v395
    %v397 = vmin.f32 %v396, 1.0
    %v398 = vmax.f32 %v397, -1.0
    %v399 = vmul.f32 %v352, %v352
    %v400 = vmin.f32 16.0, %v399
    %v401 = vmul.f32 %v400, 2.1237322e-06
    %v402 = vadd.f32 %v401, 0.00028619796
    %v403 = vmul.f32 %v400, %v402
    %v404 = vadd.f32 %v403, 0.0036580483
    %v405 = vmul.f32 %v400, %v404
    %v406 = vadd.f32 %v405, 0.05243302
    %v407 = vmul.f32 %v400, %v406
    %v408 = vadd.f32 %v407, 0.18741608
    %v409 = vmul.f32 %v400, %v408
    %v410 = vadd.f32 %v409, 1.1283791
    %v411 = vmul.f32 %v352, %v410
    %v412 = vmul.f32 %v400, 3.8918573e-05
    %v413 = vadd.f32 %v412, 0.001143296
    %v414 = vmul.f32 %v400, %v413
    %v415 = vadd.f32 %v414, 0.014752088
    %v416 = vmul.f32 %v400, %v415
    %v417 = vadd.f32 %v416, 0.112945676
    %v418 = vmul.f32 %v400, %v417
    %v419 = vadd.f32 %v418, 0.4994258
    %v420 = vmul.f32 %v400, %v419
    %v421 = vadd.f32 %v420, 1.0
    %v422 = vrcp.pop %v421
    %v423 = vmul.f32 %v421, %v422
    %v424 = vsub.f32 1.0, %v423
    %v425 = vmul.f32 %v422, %v424
    %v426 = vadd.f32 %v422, %v425
    %vm427 = vweird.f32 %v421
    %vm428 = vweird.f32 %v422
    %vm429 = vmor %vm427, %vm428
    %v430 = vsel %vm429, %v422, %v426
    %v431 = vand.u32 2147483647, %v421
    %vm432 = vcmp.eq.f32.partialorder %v431, 8.507059e+37
    %v433 = vand.u32 %v421, 2147483648
    %v434 = vor.u32 1.1754944e-38, %v433
    %v435 = vsel %vm432, %v434, %v430
    %v436 = vmul.f32 %v411, %v435
    %v437 = vmin.f32 %v436, 1.0
    %v438 = vmax.f32 %v437, -1.0
    %v439 = vmul.f32 %v353, %v353
    %v440 = vmin.f32 16.0, %v439
    %v441 = vmul.f32 %v440, 2.1237322e-06
    %v442 = vadd.f32 %v441, 0.00028619796
    %v443 = vmul.f32 %v440, %v442
    %v444 = vadd.f32 %v443, 0.0036580483
    %v445 = vmul.f32 %v440, %v444
    %v446 = vadd.f32 %v445, 0.05243302
    %v447 = vmul.f32 %v440, %v446
    %v448 = vadd.f32 %v447, 0.18741608
    %v449 = vmul.f32 %v440, %v448
    %v450 = vadd.f32 %v449, 1.1283791
    %v451 = vmul.f32 %v353, %v450
    %v452 = vmul.f32 %v440, 3.8918573e-05
    %v453 = vadd.f32 %v452, 0.001143296
    %v454 = vmul.f32 %v440, %v453
    %v455 = vadd.f32 %v454, 0.014752088
    %v456 = vmul.f32 %v440, %v455
    %v457 = vadd.f32 %v456, 0.112945676
    %v458 = vmul.f32 %v440, %v457
    %v459 = vadd.f32 %v458, 0.4994258
    %v460 = vmul.f32 %v440, %v459
    %v461 = vadd.f32 %v460, 1.0
    %v462 = vrcp.pop %v461
    %v463 = vmul.f32 %v461, %v462
    %v464 = vsub.f32 1.0, %v463
    %v465 = vmul.f32 %v462, %v464
    %v466 = vadd.f32 %v462, %v465
    %vm467 = vweird.f32 %v461
    %vm468 = vweird.f32 %v462
    %vm469 = vmor %vm467, %vm468
    %v470 = vsel %vm469, %v462, %v466
    %v471 = vand.u32 2147483647, %v461
    %vm472 = vcmp.eq.f32.partialorder %v471, 8.507059e+37
    %v473 = vand.u32 %v461, 2147483648
    %v474 = vor.u32 1.1754944e-38, %v473
    %v475 = vsel %vm472, %v474, %v470
    %v476 = vmul.f32 %v451, %v475
    %v477 = vmin.f32 %v476, 1.0
    %v478 = vmax.f32 %v477, -1.0
    %v479 = vmul.f32 %v354, %v354
    %v480 = vmin.f32 16.0, %v479
    %v481 = vmul.f32 %v480, 2.1237322e-06
    %v482 = vadd.f32 %v481, 0.00028619796
    %v483 = vmul.f32 %v480, %v482
    %v484 = vadd.f32 %v483, 0.0036580483
    %v485 = vmul.f32 %v480, %v484
    %v486 = vadd.f32 %v485, 0.05243302
    %v487 = vmul.f32 %v480, %v486
    %v488 = vadd.f32 %v487, 0.18741608
    %v489 = vmul.f32 %v480, %v488
    %v490 = vadd.f32 %v489, 1.1283791
    %v491 = vmul.f32 %v354, %v490
    %v492 = vmul.f32 %v480, 3.8918573e-05
    %v493 = vadd.f32 %v492, 0.001143296
    %v494 = vmul.f32 %v480, %v493
    %v495 = vadd.f32 %v494, 0.014752088
    %v496 = vmul.f32 %v480, %v495
    %v497 = vadd.f32 %v496, 0.112945676
    %v498 = vmul.f32 %v480, %v497
    %v499 = vadd.f32 %v498, 0.4994258
    %v500 = vmul.f32 %v480, %v499
    %v501 = vadd.f32 %v500, 1.0
    %v502 = vrcp.pop %v501
    %v503 = vmul.f32 %v501, %v502
    %v504 = vsub.f32 1.0, %v503
    %v505 = vmul.f32 %v502, %v504
    %v506 = vadd.f32 %v502, %v505
    %vm507 = vweird.f32 %v501
    %vm508 = vweird.f32 %v502
    %vm509 = vmor %vm507, %vm508
    %v510 = vsel %vm509, %v502, %v506
    %v511 = vand.u32 2147483647, %v501
    %vm512 = vcmp.eq.f32.partialorder %v511, 8.507059e+37
    %v513 = vand.u32 %v501, 2147483648
    %v514 = vor.u32 1.1754944e-38, %v513
    %v515 = vsel %vm512, %v514, %v510
    %v516 = vmul.f32 %v491, %v515
    %v517 = vmin.f32 %v516, 1.0
    %v518 = vmax.f32 %v517, -1.0
    %v519 = vmul.f32 %v355, %v355
    %v520 = vmin.f32 16.0, %v519
    %v521 = vmul.f32 %v520, 2.1237322e-06
    %v522 = vadd.f32 %v521, 0.00028619796
    %v523 = vmul.f32 %v520, %v522
    %v524 = vadd.f32 %v523, 0.0036580483
    %v525 = vmul.f32 %v520, %v524
    %v526 = vadd.f32 %v525, 0.05243302
    %v527 = vmul.f32 %v520, %v526
    %v528 = vadd.f32 %v527, 0.18741608
    %v529 = vmul.f32 %v520, %v528
    %v530 = vadd.f32 %v529, 1.1283791
    %v531 = vmul.f32 %v355, %v530
    %v532 = vmul.f32 %v520, 3.8918573e-05
    %v533 = vadd.f32 %v532, 0.001143296
    %v534 = vmul.f32 %v520, %v533
    %v535 = vadd.f32 %v534, 0.014752088
    %v536 = vmul.f32 %v520, %v535
    %v537 = vadd.f32 %v536, 0.112945676
    %v538 = vmul.f32 %v520, %v537
    %v539 = vadd.f32 %v538, 0.4994258
    %v540 = vmul.f32 %v520, %v539
    %v541 = vadd.f32 %v540, 1.0
    %v542 = vrcp.pop %v541
    %v543 = vmul.f32 %v541, %v542
    %v544 = vsub.f32 1.0, %v543
    %v545 = vmul.f32 %v542, %v544
    %v546 = vadd.f32 %v542, %v545
    %vm547 = vweird.f32 %v541
    %vm548 = vweird.f32 %v542
    %vm549 = vmor %vm547, %vm548
    %v550 = vsel %vm549, %v542, %v546
    %v551 = vand.u32 2147483647, %v541
    %vm552 = vcmp.eq.f32.partialorder %v551, 8.507059e+37
    %v553 = vand.u32 %v541, 2147483648
    %v554 = vor.u32 1.1754944e-38, %v553
    %v555 = vsel %vm552, %v554, %v550
    %v556 = vmul.f32 %v531, %v555
    %v557 = vmin.f32 %v556, 1.0
    %v558 = vmax.f32 %v557, -1.0
    %v559 = vmul.f32 %v356, %v356
    %v560 = vmin.f32 16.0, %v559
    %v561 = vmul.f32 %v560, 2.1237322e-06
    %v562 = vadd.f32 %v561, 0.00028619796
    %v563 = vmul.f32 %v560, %v562
    %v564 = vadd.f32 %v563, 0.0036580483
    %v565 = vmul.f32 %v560, %v564
    %v566 = vadd.f32 %v565, 0.05243302
    %v567 = vmul.f32 %v560, %v566
    %v568 = vadd.f32 %v567, 0.18741608
    %v569 = vmul.f32 %v560, %v568
    %v570 = vadd.f32 %v569, 1.1283791
    %v571 = vmul.f32 %v356, %v570
    %v572 = vmul.f32 %v560, 3.8918573e-05
    %v573 = vadd.f32 %v572, 0.001143296
    %v574 = vmul.f32 %v560, %v573
    %v575 = vadd.f32 %v574, 0.014752088
    %v576 = vmul.f32 %v560, %v575
    %v577 = vadd.f32 %v576, 0.112945676
    %v578 = vmul.f32 %v560, %v577
    %v579 = vadd.f32 %v578, 0.4994258
    %v580 = vmul.f32 %v560, %v579
    %v581 = vadd.f32 %v580, 1.0
    %v582 = vrcp.pop %v581
    %v583 = vmul.f32 %v581, %v582
    %v584 = vsub.f32 1.0, %v583
    %v585 = vmul.f32 %v582, %v584
    %v586 = vadd.f32 %v582, %v585
    %vm587 = vweird.f32 %v581
    %vm588 = vweird.f32 %v582
    %vm589 = vmor %vm587, %vm588
    %v590 = vsel %vm589, %v582, %v586
    %v591 = vand.u32 2147483647, %v581
    %vm592 = vcmp.eq.f32.partialorder %v591, 8.507059e+37
    %v593 = vand.u32 %v581, 2147483648
    %v594 = vor.u32 1.1754944e-38, %v593
    %v595 = vsel %vm592, %v594, %v590
    %v596 = vmul.f32 %v571, %v595
    %v597 = vmin.f32 %v596, 1.0
    %v598 = vmax.f32 %v597, -1.0
    %v599 = vmul.f32 %v357, %v357
    %v600 = vmin.f32 16.0, %v599
    %v601 = vmul.f32 %v600, 2.1237322e-06
    %v602 = vadd.f32 %v601, 0.00028619796
    %v603 = vmul.f32 %v600, %v602
    %v604 = vadd.f32 %v603, 0.0036580483
    %v605 = vmul.f32 %v600, %v604
    %v606 = vadd.f32 %v605, 0.05243302
    %v607 = vmul.f32 %v600, %v606
    %v608 = vadd.f32 %v607, 0.18741608
    %v609 = vmul.f32 %v600, %v608
    %v610 = vadd.f32 %v609, 1.1283791
    %v611 = vmul.f32 %v357, %v610
    %v612 = vmul.f32 %v600, 3.8918573e-05
    %v613 = vadd.f32 %v612, 0.001143296
    %v614 = vmul.f32 %v600, %v613
    %v615 = vadd.f32 %v614, 0.014752088
    %v616 = vmul.f32 %v600, %v615
    %v617 = vadd.f32 %v616, 0.112945676
    %v618 = vmul.f32 %v600, %v617
    %v619 = vadd.f32 %v618, 0.4994258
    %v620 = vmul.f32 %v600, %v619
    %v621 = vadd.f32 %v620, 1.0
    %v622 = vrcp.pop %v621
    %v623 = vmul.f32 %v621, %v622
    %v624 = vsub.f32 1.0, %v623
    %v625 = vmul.f32 %v622, %v624
    %v626 = vadd.f32 %v622, %v625
    %vm627 = vweird.f32 %v621
    %vm628 = vweird.f32 %v622
    %vm629 = vmor %vm627, %vm628
    %v630 = vsel %vm629, %v622, %v626
    %v631 = vand.u32 2147483647, %v621
    %vm632 = vcmp.eq.f32.partialorder %v631, 8.507059e+37
    %v633 = vand.u32 %v621, 2147483648
    %v634 = vor.u32 1.1754944e-38, %v633
    %v635 = vsel %vm632, %v634, %v630
    %v636 = vmul.f32 %v611, %v635
    %v637 = vmin.f32 %v636, 1.0
    %v638 = vmax.f32 %v637, -1.0
    %v639 = vmul.f32 %v358, %v358
    %v640 = vmin.f32 16.0, %v639
    %v641 = vmul.f32 %v640, 2.1237322e-06
    %v642 = vadd.f32 %v641, 0.00028619796
    %v643 = vmul.f32 %v640, %v642
    %v644 = vadd.f32 %v643, 0.0036580483
    %v645 = vmul.f32 %v640, %v644
    %v646 = vadd.f32 %v645, 0.05243302
    %v647 = vmul.f32 %v640, %v646
    %v648 = vadd.f32 %v647, 0.18741608
    %v649 = vmul.f32 %v640, %v648
    %v650 = vadd.f32 %v649, 1.1283791
    %v651 = vmul.f32 %v358, %v650
    %v652 = vmul.f32 %v640, 3.8918573e-05
    %v653 = vadd.f32 %v652, 0.001143296
    %v654 = vmul.f32 %v640, %v653
    %v655 = vadd.f32 %v654, 0.014752088
    %v656 = vmul.f32 %v640, %v655
    %v657 = vadd.f32 %v656, 0.112945676
    %v658 = vmul.f32 %v640, %v657
    %v659 = vadd.f32 %v658, 0.4994258
    %v660 = vmul.f32 %v640, %v659
    %v661 = vadd.f32 %v660, 1.0
    %v662 = vrcp.pop %v661
    %v663 = vmul.f32 %v661, %v662
    %v664 = vsub.f32 1.0, %v663
    %v665 = vmul.f32 %v662, %v664
    %v666 = vadd.f32 %v662, %v665
    %vm667 = vweird.f32 %v661
    %vm668 = vweird.f32 %v662
    %vm669 = vmor %vm667, %vm668
    %v670 = vsel %vm669, %v662, %v666
    %v671 = vand.u32 2147483647, %v661
    %vm672 = vcmp.eq.f32.partialorder %v671, 8.507059e+37
    %v673 = vand.u32 %v661, 2147483648
    %v674 = vor.u32 1.1754944e-38, %v673
    %v675 = vsel %vm672, %v674, %v670
    %v676 = vmul.f32 %v651, %v675
    %v677 = vmin.f32 %v676, 1.0
    %v678 = vmax.f32 %v677, -1.0
    %v679 = vadd.f32 %v398, 1.0
    %v680 = vadd.f32 %v438, 1.0
    %v681 = vadd.f32 %v478, 1.0
    %v682 = vadd.f32 %v518, 1.0
    %v683 = vadd.f32 %v558, 1.0
    %v684 = vadd.f32 %v598, 1.0
    %v685 = vadd.f32 %v638, 1.0
    %v686 = vadd.f32 %v678, 1.0
    %v687 = vmul.f32 %v343, %v679
    %v688 = vmul.f32 %v344, %v680
    %v689 = vmul.f32 %v345, %v681
    %v690 = vmul.f32 %v346, %v682
    %v691 = vmul.f32 %v347, %v683
    %v692 = vmul.f32 %v348, %v684
    %v693 = vmul.f32 %v349, %v685
    %v694 = vmul.f32 %v350, %v686
    %v695 = vpack.c.bf16 %v691, %v687
    %v696 = vpack.c.bf16 %v692, %v688
    %v697 = vpack.c.bf16 %v693, %v689
    %v698 = vpack.c.bf16 %v694, %v690
    %v699 = vld [vmem:[#allocation8] sm:$0xf]
    %v700 = vld [vmem:[#allocation8 + $0x4] sm:$0xf]
    %v701 = vld [vmem:[#allocation8 + $0x8] sm:$0xf]
    %v702 = vld [vmem:[#allocation8 + $0xc] sm:$0xf]
    %v703 = vld [vmem:[#allocation8 + $0x10] sm:$0xf]
    %v704 = vld [vmem:[#allocation8 + $0x14] sm:$0xf]
    %v705 = vld [vmem:[#allocation8 + $0x18] sm:$0xf]
    %v706 = vld [vmem:[#allocation8 + $0x1c] sm:$0xf]
    %v707 = vld [vmem:[#allocation8 + $0x20] sm:$0xf]
    %v708 = vld [vmem:[#allocation8 + $0x24] sm:$0xf]
    %v709 = vld [vmem:[#allocation8 + $0x28] sm:$0xf]
    %v710 = vld [vmem:[#allocation8 + $0x2c] sm:$0xf]
    %v711 = vld [vmem:[#allocation8 + $0x30] sm:$0xf]
    %v712 = vld [vmem:[#allocation8 + $0x34] sm:$0xf]
    %v713 = vld [vmem:[#allocation8 + $0x38] sm:$0xf]
    %v714 = vld [vmem:[#allocation8 + $0x3c] sm:$0xf]
    %v715 = vld [vmem:[#allocation8 + $0x40] sm:$0xf]
    %v716 = vld [vmem:[#allocation8 + $0x44] sm:$0xf]
    %v717 = vld [vmem:[#allocation8 + $0x48] sm:$0xf]
    %v718 = vld [vmem:[#allocation8 + $0x4c] sm:$0xf]
    %v719 = vld [vmem:[#allocation8 + $0x50] sm:$0xf]
    %v720 = vld [vmem:[#allocation8 + $0x54] sm:$0xf]
    %v721 = vld [vmem:[#allocation8 + $0x58] sm:$0xf]
    %v722 = vld [vmem:[#allocation8 + $0x5c] sm:$0xf]
    %v723 = vld [vmem:[#allocation8 + $0x60] sm:$0xf]
    %v724 = vld [vmem:[#allocation8 + $0x64] sm:$0xf]
    %v725 = vld [vmem:[#allocation8 + $0x68] sm:$0xf]
    %v726 = vld [vmem:[#allocation8 + $0x6c] sm:$0xf]
    %v727 = vld [vmem:[#allocation8 + $0x70] sm:$0xf]
    %v728 = vld [vmem:[#allocation8 + $0x74] sm:$0xf]
    %v729 = vld [vmem:[#allocation8 + $0x78] sm:$0xf]
    %v730 = vld [vmem:[#allocation8 + $0x7c] sm:$0xf]
    %v731 = vld [vmem:[#allocation8 + $0x80] sm:$0xf]
    %v732 = vld [vmem:[#allocation8 + $0x84] sm:$0xf]
    %v733 = vld [vmem:[#allocation8 + $0x88] sm:$0xf]
    %v734 = vld [vmem:[#allocation8 + $0x8c] sm:$0xf]
    %v735 = vld [vmem:[#allocation8 + $0x90] sm:$0xf]
    %v736 = vld [vmem:[#allocation8 + $0x94] sm:$0xf]
    %v737 = vld [vmem:[#allocation8 + $0x98] sm:$0xf]
    %v738 = vld [vmem:[#allocation8 + $0x9c] sm:$0xf]
    %v739 = vld [vmem:[#allocation8 + $0xa0] sm:$0xf]
    %v740 = vld [vmem:[#allocation8 + $0xa4] sm:$0xf]
    %v741 = vld [vmem:[#allocation8 + $0xa8] sm:$0xf]
    %v742 = vld [vmem:[#allocation8 + $0xac] sm:$0xf]
    %v743 = vld [vmem:[#allocation8 + $0xb0] sm:$0xf]
    %v744 = vld [vmem:[#allocation8 + $0xb4] sm:$0xf]
    %v745 = vld [vmem:[#allocation8 + $0xb8] sm:$0xf]
    %v746 = vld [vmem:[#allocation8 + $0xbc] sm:$0xf]
    %v747 = vld [vmem:[#allocation8 + $0xc0] sm:$0xf]
    %v748 = vld [vmem:[#allocation8 + $0xc4] sm:$0xf]
    %v749 = vld [vmem:[#allocation8 + $0xc8] sm:$0xf]
    %v750 = vld [vmem:[#allocation8 + $0xcc] sm:$0xf]
    %v751 = vld [vmem:[#allocation8 + $0xd0] sm:$0xf]
    %v752 = vld [vmem:[#allocation8 + $0xd4] sm:$0xf]
    %v753 = vld [vmem:[#allocation8 + $0xd8] sm:$0xf]
    %v754 = vld [vmem:[#allocation8 + $0xdc] sm:$0xf]
    %v755 = vld [vmem:[#allocation8 + $0xe0] sm:$0xf]
    %v756 = vld [vmem:[#allocation8 + $0xe4] sm:$0xf]
    %v757 = vld [vmem:[#allocation8 + $0xe8] sm:$0xf]
    %v758 = vld [vmem:[#allocation8 + $0xec] sm:$0xf]
    %v759 = vld [vmem:[#allocation8 + $0xf0] sm:$0xf]
    %v760 = vld [vmem:[#allocation8 + $0xf4] sm:$0xf]
    %v761 = vld [vmem:[#allocation8 + $0xf8] sm:$0xf]
    %v762 = vld [vmem:[#allocation8 + $0xfc] sm:$0xf]
    %v763 = vld [vmem:[%s4] sm:$0x1]
    %v765 = vperm.slane %v763, 0
    %v831 = vunpack.c.l.b16 %v699
    %v832 = vunpack.c.l.b16 %v700
    %v833 = vunpack.c.l.b16 %v701
    %v834 = vunpack.c.l.b16 %v702
    %v835 = vunpack.c.l.b16 %v703
    %v836 = vunpack.c.l.b16 %v704
    %v837 = vunpack.c.l.b16 %v705
    %v838 = vunpack.c.l.b16 %v706
    %v839 = vunpack.c.l.b16 %v707
    %v840 = vunpack.c.l.b16 %v708
    %v841 = vunpack.c.l.b16 %v709
    %v842 = vunpack.c.l.b16 %v710
    %v843 = vunpack.c.l.b16 %v711
    %v844 = vunpack.c.l.b16 %v712
    %v845 = vunpack.c.l.b16 %v713
    %v846 = vunpack.c.l.b16 %v714
    %v847 = vunpack.c.l.b16 %v715
    %v848 = vunpack.c.l.b16 %v716
    %v849 = vunpack.c.l.b16 %v717
    %v850 = vunpack.c.l.b16 %v718
    %v851 = vunpack.c.l.b16 %v719
    %v852 = vunpack.c.l.b16 %v720
    %v853 = vunpack.c.l.b16 %v721
    %v854 = vunpack.c.l.b16 %v722
    %v855 = vunpack.c.l.b16 %v723
    %v856 = vunpack.c.l.b16 %v724
    %v857 = vunpack.c.l.b16 %v725
    %v858 = vunpack.c.l.b16 %v726
    %v859 = vunpack.c.l.b16 %v727
    %v860 = vunpack.c.l.b16 %v728
    %v861 = vunpack.c.l.b16 %v729
    %v862 = vunpack.c.l.b16 %v730
    %v863 = vunpack.c.l.b16 %v731
    %v864 = vunpack.c.l.b16 %v732
    %v865 = vunpack.c.l.b16 %v733
    %v866 = vunpack.c.l.b16 %v734
    %v867 = vunpack.c.l.b16 %v735
    %v868 = vunpack.c.l.b16 %v736
    %v869 = vunpack.c.l.b16 %v737
    %v870 = vunpack.c.l.b16 %v738
    %v871 = vunpack.c.l.b16 %v739
    %v872 = vunpack.c.l.b16 %v740
    %v873 = vunpack.c.l.b16 %v741
    %v874 = vunpack.c.l.b16 %v742
    %v875 = vunpack.c.l.b16 %v743
    %v876 = vunpack.c.l.b16 %v744
    %v877 = vunpack.c.l.b16 %v745
    %v878 = vunpack.c.l.b16 %v746
    %v879 = vunpack.c.l.b16 %v747
    %v880 = vunpack.c.l.b16 %v748
    %v881 = vunpack.c.l.b16 %v749
    %v882 = vunpack.c.l.b16 %v750
    %v883 = vunpack.c.l.b16 %v751
    %v884 = vunpack.c.l.b16 %v752
    %v885 = vunpack.c.l.b16 %v753
    %v886 = vunpack.c.l.b16 %v754
    %v887 = vunpack.c.l.b16 %v755
    %v888 = vunpack.c.l.b16 %v756
    %v889 = vunpack.c.l.b16 %v757
    %v890 = vunpack.c.l.b16 %v758
    %v891 = vunpack.c.l.b16 %v759
    %v892 = vunpack.c.l.b16 %v760
    %v893 = vunpack.c.l.b16 %v761
    %v894 = vunpack.c.l.b16 %v762
    %v895 = vpack.c.b16 %v832, %v831
    %v896 = vpack.c.b16 %v834, %v833
    %v897 = vpack.c.b16 %v836, %v835
    %v898 = vpack.c.b16 %v838, %v837
    %v899 = vpack.c.b16 %v840, %v839
    %v900 = vpack.c.b16 %v842, %v841
    %v901 = vpack.c.b16 %v844, %v843
    %v902 = vpack.c.b16 %v846, %v845
    %v903 = vpack.c.b16 %v848, %v847
    %v904 = vpack.c.b16 %v850, %v849
    %v905 = vpack.c.b16 %v852, %v851
    %v906 = vpack.c.b16 %v854, %v853
    %v907 = vpack.c.b16 %v856, %v855
    %v908 = vpack.c.b16 %v858, %v857
    %v909 = vpack.c.b16 %v860, %v859
    %v910 = vpack.c.b16 %v862, %v861
    %v911 = vpack.c.b16 %v864, %v863
    %v912 = vpack.c.b16 %v866, %v865
    %v913 = vpack.c.b16 %v868, %v867
    %v914 = vpack.c.b16 %v870, %v869
    %v915 = vpack.c.b16 %v872, %v871
    %v916 = vpack.c.b16 %v874, %v873
    %v917 = vpack.c.b16 %v876, %v875
    %v918 = vpack.c.b16 %v878, %v877
    %v919 = vpack.c.b16 %v880, %v879
    %v920 = vpack.c.b16 %v882, %v881
    %v921 = vpack.c.b16 %v884, %v883
    %v922 = vpack.c.b16 %v886, %v885
    %v923 = vpack.c.b16 %v888, %v887
    %v924 = vpack.c.b16 %v890, %v889
    %v925 = vpack.c.b16 %v892, %v891
    %v926 = vpack.c.b16 %v894, %v893
    %959 = vmatpush.bf16.msra.mxu0 %v902
    %960 = vmatpush.bf16.msra.mxu0 %v901
    %961 = vmatpush.bf16.msra.mxu0 %v900
    %962 = vmatpush.bf16.msra.mxu0 %v899
    %963 = vmatpush.bf16.msra.mxu0 %v898
    %964 = vmatpush.bf16.msra.mxu0 %v897
    %965 = vmatpush.bf16.msra.mxu0 %v896
    %966 = vmatpush.bf16.msra.mxu0 %v895
    %967 = vmatmul.bf16.gmra.mxu0 %v695
    %v968 = vpop.f32.mrf.mxu0
    %v969 = vadd.f32 %v765, %v968
    %v970 = vpop.f32.mrf.mxu0
    %v971 = vadd.f32 %v765, %v970
    %972 = vdwg.mxu0
    %973 = vmatpush.bf16.msra.mxu0 %v910
    %974 = vmatpush.bf16.msra.mxu0 %v909
    %975 = vmatpush.bf16.msra.mxu0 %v908
    %976 = vmatpush.bf16.msra.mxu0 %v907
    %977 = vmatpush.bf16.msra.mxu0 %v906
    %978 = vmatpush.bf16.msra.mxu0 %v905
    %979 = vmatpush.bf16.msra.mxu0 %v904
    %980 = vmatpush.bf16.msra.mxu0 %v903
    %981 = vmatmul.bf16.gmra.mxu0 %v696
    %v982 = vpop.f32.mrf.mxu0
    %v983 = vadd.f32 %v969, %v982
    %v984 = vpop.f32.mrf.mxu0
    %v985 = vadd.f32 %v971, %v984
    %986 = vdwg.mxu0
    %987 = vmatpush.bf16.msra.mxu0 %v918
    %988 = vmatpush.bf16.msra.mxu0 %v917
    %989 = vmatpush.bf16.msra.mxu0 %v916
    %990 = vmatpush.bf16.msra.mxu0 %v915
    %991 = vmatpush.bf16.msra.mxu0 %v914
    %992 = vmatpush.bf16.msra.mxu0 %v913
    %993 = vmatpush.bf16.msra.mxu0 %v912
    %994 = vmatpush.bf16.msra.mxu0 %v911
    %995 = vmatmul.bf16.gmra.mxu0 %v697
    %v996 = vpop.f32.mrf.mxu0
    %v997 = vadd.f32 %v983, %v996
    %v998 = vpop.f32.mrf.mxu0
    %v999 = vadd.f32 %v985, %v998
    %1000 = vdwg.mxu0
    %1001 = vmatpush.bf16.msra.mxu0 %v926
    %1002 = vmatpush.bf16.msra.mxu0 %v925
    %1003 = vmatpush.bf16.msra.mxu0 %v924
    %1004 = vmatpush.bf16.msra.mxu0 %v923
    %1005 = vmatpush.bf16.msra.mxu0 %v922
    %1006 = vmatpush.bf16.msra.mxu0 %v921
    %1007 = vmatpush.bf16.msra.mxu0 %v920
    %1008 = vmatpush.bf16.msra.mxu0 %v919
    %1009 = vmatmul.bf16.gmra.mxu0 %v698
    %v1010 = vpop.f32.mrf.mxu0
    %v1011 = vadd.f32 %v997, %v1010
    %v1012 = vpop.f32.mrf.mxu0
    %v1013 = vadd.f32 %v999, %v1012
    %1014 = vdwg.mxu0
    %1015 = vst [vmem:[#allocation10] sm:$0xff] %v1011
    %1016 = vst [vmem:[#allocation10 + $0x8] sm:$0xff] %v1013
    // Predicated region
    $region38: #{tpu_custom_call.1} parent=1 // pred_check
      _
    $region39: #{tpu_custom_call.1} parent=1 // pred_check_branch
      %1018 = sbr.rel (0) target = $region41
    $region40: #{tpu_custom_call.1} parent=1 // pred_region
      %1020 = vsyncadd [#allocation4], 0
      %s1021 = sshll.u32 [#allocation10], 4
      %s1022 = int_to_ptr.vmem [resolvable:$true] %s1021
      %s1023 = sshll.u32 %s5, 4
      %s1024 = int_to_ptr.hbm [resolvable:$true] %s1023
      %1029 = dma.vmem_to_hbm [thread:$0]  %s1022, 256, %s1024, [#allocation4], 128, 128, 8
    $region41: #{tpu_custom_call.1} parent=1 // pred_fallthru
      _
    // Predicated region
    $region42: #{tpu_custom_call.1} parent=1 // pred_check
      _
    $region43: #{tpu_custom_call.1} parent=1 // pred_check_branch
      %1031 = sbr.rel (0) target = $region45
    $region44: #{tpu_custom_call.1} parent=1 // pred_region
      %1033 = dma.done [#allocation4], 256
    $region45: #{tpu_custom_call.1} parent=1 // pred_fallthru
      _
    %1034 = vsyncpa [#allocation3], 1
    %1035 = vsyncpa [#allocation6], 1
    %1036 = vsyncpa [#allocation9], 1
    %1037 = vsyncpa [#allocation4], 1

// kernel: tpu_custom_call.1
$region0: #{tpu_custom_call.1}
  #allocation0 [shape = 'u32[]', space=smem, size = 0x4, offset = 0x4, fixed_abs, tag = 'smem constant byte address 0x4 - core index']
  #allocation1 [shape = 'u32[72,128]{1,0:T(1,128)}', space=vmem, size = 0x9000, scoped, tag = 'internal scratch']
  %s0 = inlined_call_operand.hbm [shape: f32[16,128], index: 0, kind: input, shape index: {}]
  %s1 = inlined_call_operand.hbm [shape: bf16[128,512], index: 1, kind: input, shape index: {}]
  %s2 = inlined_call_operand.hbm [shape: f32[1,512], index: 2, kind: input, shape index: {}]
  %s3 = inlined_call_operand.hbm [shape: bf16[512,128], index: 3, kind: input, shape index: {}]
  %s4 = inlined_call_operand.vmem [shape: f32[1,128], index: 4, kind: input, shape index: {}]
  %s5 = inlined_call_operand.hbm [shape: f32[16,128], index: 5, kind: output, shape index: {}]
  %s6 = sld [smem:[#allocation0]]
  $region46: #{tpu_custom_call.1} parent=0
    _
  %s8 = ssub.s32 1, %s6
  %s9 = scalar_select 0, %s8, %s6
  $region1: #{tpu_custom_call.1} parent=0
    #allocation2 [shape = 'u8[8192]{0}', space=vmem, size = 0x2000, scoped, tag = 'input window, operand 0, single buffered']
    #allocation3 [shape = 's32[1]{0}', space=sflag, size = 0x4, scoped, tag = 'scoped memory for tpu_custom_call.1']
    #allocation4 [shape = 's32[1]{0}', space=sflag, size = 0x4, scoped, tag = 'scoped memory for tpu_custom_call.1']
    #allocation5 [shape = 'u8[131072]{0}', space=vmem, size = 0x20000, scoped, tag = 'input window, operand 1, single buffered']
    #allocation6 [shape = 's32[1]{0}', space=sflag, size = 0x4, scoped, tag = 'scoped memory for tpu_custom_call.1']
    #allocation7 [shape = 'u8[2048]{0}', space=vmem, size = 0x800, scoped, tag = 'input window, operand 2, single buffered']
    #allocation8 [shape = 'u8[131072]{0}', space=vmem, size = 0x20000, scoped, tag = 'input window, operand 3, single buffered']
    #allocation9 [shape = 's32[1]{0}', space=sflag, size = 0x4, scoped, tag = 'scoped memory for tpu_custom_call.1']
    #allocation10 [shape = 'u8[8192]{0}', space=vmem, size = 0x2000, scoped, tag = 'output window, operand 0, single buffered']
    %10 = vsyncpa [#allocation3], 0
    %11 = vsyncpa [#allocation6], 0
    %12 = vsyncpa [#allocation9], 0
    %13 = vsyncpa [#allocation4], 0
    // Predicated region
    $region2: #{tpu_custom_call.1} parent=1 // pred_check
      _
    $region3: #{tpu_custom_call.1} parent=1 // pred_check_branch
      %15 = sbr.rel (0) target = $region5
    $region4: #{tpu_custom_call.1} parent=1 // pred_region
      %17 = vsyncadd [#allocation3], 0
      %s18 = sshll.u32 %s0, 4
      %s19 = int_to_ptr.hbm [resolvable:$true] %s18
      %s20 = sshll.u32 [#allocation2], 4
      %s21 = int_to_ptr.vmem [resolvable:$true] %s20
      %26 = dma.hbm_to_vmem [thread:$0]  %s19, 256, %s21, [#allocation3], 128, 128, 8
    $region5: #{tpu_custom_call.1} parent=1 // pred_fallthru
      _
    // Predicated region
    $region6: #{tpu_custom_call.1} parent=1 // pred_check
      _
    $region7: #{tpu_custom_call.1} parent=1 // pred_check_branch
      %28 = sbr.rel (0) target = $region9
    $region8: #{tpu_custom_call.1} parent=1 // pred_region
      %30 = vsyncadd [#allocation6], 0
      %s31 = sshll.u32 %s1, 4
      %s32 = int_to_ptr.hbm [resolvable:$true] %s31
      %s33 = sshll.u32 [#allocation5], 4
      %s34 = int_to_ptr.vmem [resolvable:$true] %s33
      %39 = dma.hbm_to_vmem [thread:$0]  %s32, 4096, %s34, [#allocation6], 256, 256, 16
    $region9: #{tpu_custom_call.1} parent=1 // pred_fallthru
      _
    // Predicated region
    $region10: #{tpu_custom_call.1} parent=1 // pred_check
      _
    $region11: #{tpu_custom_call.1} parent=1 // pred_check_branch
      %41 = sbr.rel (0) target = $region13
    $region12: #{tpu_custom_call.1} parent=1 // pred_region
      %43 = vsyncadd [#allocation6], 0
      %s45 = sshll.u32 %s2, 4
      %s46 = int_to_ptr.hbm [resolvable:$true] %s45
      %s47 = sshll.u32 [#allocation7], 4
      %s48 = int_to_ptr.vmem [resolvable:$true] %s47
      %50 = dma.hbm_to_vmem [thread:$0]  %s46, 64, %s48, [#allocation6]
    $region13: #{tpu_custom_call.1} parent=1 // pred_fallthru
      _
    // Predicated region
    $region14: #{tpu_custom_call.1} parent=1 // pred_check
      _
    $region15: #{tpu_custom_call.1} parent=1 // pred_check_branch
      %52 = sbr.rel (0) target = $region17
    $region16: #{tpu_custom_call.1} parent=1 // pred_region
      %54 = vsyncadd [#allocation9], 0
      %s55 = sshll.u32 %s3, 4
      %s56 = int_to_ptr.hbm [resolvable:$true] %s55
      %s57 = sshll.u32 [#allocation8], 4
      %s58 = int_to_ptr.vmem [resolvable:$true] %s57
      %63 = dma.hbm_to_vmem [thread:$0]  %s56, 4096, %s58, [#allocation9], 64, 64, 4
    $region17: #{tpu_custom_call.1} parent=1 // pred_fallthru
      _
    // Predicated region
    $region18: #{tpu_custom_call.1} parent=1 // pred_check
      _
    $region19: #{tpu_custom_call.1} parent=1 // pred_check_branch
      %65 = sbr.rel (0) target = $region21
    $region20: #{tpu_custom_call.1} parent=1 // pred_region
      _
    $region21: #{tpu_custom_call.1} parent=1 // pred_fallthru
      _
    // Predicated region
    $region22: #{tpu_custom_call.1} parent=1 // pred_check
      _
    $region23: #{tpu_custom_call.1} parent=1 // pred_check_branch
      %67 = sbr.rel (0) target = $region25
    $region24: #{tpu_custom_call.1} parent=1 // pred_region
      %69 = dma.done [#allocation3], 256
    $region25: #{tpu_custom_call.1} parent=1 // pred_fallthru
      _
    // Predicated region
    $region26: #{tpu_custom_call.1} parent=1 // pred_check
      _
    $region27: #{tpu_custom_call.1} parent=1 // pred_check_branch
      %71 = sbr.rel (0) target = $region29
    $region28: #{tpu_custom_call.1} parent=1 // pred_region
      %73 = dma.done [#allocation6], 4096
    $region29: #{tpu_custom_call.1} parent=1 // pred_fallthru
      _
    // Predicated region
    $region30: #{tpu_custom_call.1} parent=1 // pred_check
      _
    $region31: #{tpu_custom_call.1} parent=1 // pred_check_branch
      %75 = sbr.rel (0) target = $region33
    $region32: #{tpu_custom_call.1} parent=1 // pred_region
      %77 = dma.done [#allocation6], 64
    $region33: #{tpu_custom_call.1} parent=1 // pred_fallthru
      _
    // Predicated region
    $region34: #{tpu_custom_call.1} parent=1 // pred_check
      _
    $region35: #{tpu_custom_call.1} parent=1 // pred_check_branch
      %79 = sbr.rel (0) target = $region37
    $region36: #{tpu_custom_call.1} parent=1 // pred_region
      %81 = dma.done [#allocation9], 4096
    $region37: #{tpu_custom_call.1} parent=1 // pred_fallthru
      _
    %v82 = vld [vmem:[#allocation2] sm:$0xff]
    %v83 = vld [vmem:[#allocation2 + $0x8] sm:$0xff]
    %v84 = vpack.c.bf16 %v83, %v82
    %v85 = vld [vmem:[#allocation5] sm:$0xff]
    %v86 = vld [vmem:[#allocation5 + $0x8] sm:$0xff]
    %v87 = vld [vmem:[#allocation5 + $0x10] sm:$0xff]
    %v88 = vld [vmem:[#allocation5 + $0x18] sm:$0xff]
    %v89 = vld [vmem:[#allocation5 + $0x20] sm:$0xff]
    %v90 = vld [vmem:[#allocation5 + $0x28] sm:$0xff]
    %v91 = vld [vmem:[#allocation5 + $0x30] sm:$0xff]
    %v92 = vld [vmem:[#allocation5 + $0x38] sm:$0xff]
    %v93 = vld [vmem:[#allocation5 + $0x40] sm:$0xff]
    %v94 = vld [vmem:[#allocation5 + $0x48] sm:$0xff]
    %v95 = vld [vmem:[#allocation5 + $0x50] sm:$0xff]
    %v96 = vld [vmem:[#allocation5 + $0x58] sm:$0xff]
    %v97 = vld [vmem:[#allocation5 + $0x60] sm:$0xff]
    %v98 = vld [vmem:[#allocation5 + $0x68] sm:$0xff]
    %v99 = vld [vmem:[#allocation5 + $0x70] sm:$0xff]
    %v100 = vld [vmem:[#allocation5 + $0x78] sm:$0xff]
    %v101 = vld [vmem:[#allocation5 + $0x80] sm:$0xff]
    %v102 = vld [vmem:[#allocation5 + $0x88] sm:$0xff]
    %v103 = vld [vmem:[#allocation5 + $0x90] sm:$0xff]
    %v104 = vld [vmem:[#allocation5 + $0x98] sm:$0xff]
    %v105 = vld [vmem:[#allocation5 + $0xa0] sm:$0xff]
    %v106 = vld [vmem:[#allocation5 + $0xa8] sm:$0xff]
    %v107 = vld [vmem:[#allocation5 + $0xb0] sm:$0xff]
    %v108 = vld [vmem:[#allocation5 + $0xb8] sm:$0xff]
    %v109 = vld [vmem:[#allocation5 + $0xc0] sm:$0xff]
    %v110 = vld [vmem:[#allocation5 + $0xc8] sm:$0xff]
    %v111 = vld [vmem:[#allocation5 + $0xd0] sm:$0xff]
    %v112 = vld [vmem:[#allocation5 + $0xd8] sm:$0xff]
    %v113 = vld [vmem:[#allocation5 + $0xe0] sm:$0xff]
    %v114 = vld [vmem:[#allocation5 + $0xe8] sm:$0xff]
    %v115 = vld [vmem:[#allocation5 + $0xf0] sm:$0xff]
    %v116 = vld [vmem:[#allocation5 + $0xf8] sm:$0xff]
    %v117 = vld [vmem:[#allocation7] sm:$0xf]
    %v119 = vperm.slane %v117, 0
    %v120 = vperm.slane %v117, 1
    %v121 = vperm.slane %v117, 2
    %v122 = vperm.slane %v117, 3
    %v159 = vunpack.c.l.b16 %v85
    %v160 = vunpack.c.h.b16 %v85
    %v161 = vunpack.c.l.b16 %v86
    %v162 = vunpack.c.h.b16 %v86
    %v163 = vunpack.c.l.b16 %v87
    %v164 = vunpack.c.h.b16 %v87
    %v165 = vunpack.c.l.b16 %v88
    %v166 = vunpack.c.h.b16 %v88
    %v167 = vunpack.c.l.b16 %v89
    %v168 = vunpack.c.h.b16 %v89
    %v169 = vunpack.c.l.b16 %v90
    %v170 = vunpack.c.h.b16 %v90
    %v171 = vunpack.c.l.b16 %v91
    %v172 = vunpack.c.h.b16 %v91
    %v173 = vunpack.c.l.b16 %v92
    %v174 = vunpack.c.h.b16 %v92
    %v175 = vunpack.c.l.b16 %v93
    %v176 = vunpack.c.h.b16 %v93
    %v177 = vunpack.c.l.b16 %v94
    %v178 = vunpack.c.h.b16 %v94
    %v179 = vunpack.c.l.b16 %v95
    %v180 = vunpack.c.h.b16 %v95
    %v181 = vunpack.c.l.b16 %v96
    %v182 = vunpack.c.h.b16 %v96
    %v183 = vunpack.c.l.b16 %v97
    %v184 = vunpack.c.h.b16 %v97
    %v185 = vunpack.c.l.b16 %v98
    %v186 = vunpack.c.h.b16 %v98
    %v187 = vunpack.c.l.b16 %v99
    %v188 = vunpack.c.h.b16 %v99
    %v189 = vunpack.c.l.b16 %v100
    %v190 = vunpack.c.h.b16 %v100
    %v191 = vunpack.c.l.b16 %v101
    %v192 = vunpack.c.h.b16 %v101
    %v193 = vunpack.c.l.b16 %v102
    %v194 = vunpack.c.h.b16 %v102
    %v195 = vunpack.c.l.b16 %v103
    %v196 = vunpack.c.h.b16 %v103
    %v197 = vunpack.c.l.b16 %v104
    %v198 = vunpack.c.h.b16 %v104
    %v199 = vunpack.c.l.b16 %v105
    %v200 = vunpack.c.h.b16 %v105
    %v201 = vunpack.c.l.b16 %v106
    %v202 = vunpack.c.h.b16 %v106
    %v203 = vunpack.c.l.b16 %v107
    %v204 = vunpack.c.h.b16 %v107
    %v205 = vunpack.c.l.b16 %v108
    %v206 = vunpack.c.h.b16 %v108
    %v207 = vunpack.c.l.b16 %v109
    %v208 = vunpack.c.h.b16 %v109
    %v209 = vunpack.c.l.b16 %v110
    %v210 = vunpack.c.h.b16 %v110
    %v211 = vunpack.c.l.b16 %v111
    %v212 = vunpack.c.h.b16 %v111
    %v213 = vunpack.c.l.b16 %v112
    %v214 = vunpack.c.h.b16 %v112
    %v215 = vunpack.c.l.b16 %v113
    %v216 = vunpack.c.h.b16 %v113
    %v217 = vunpack.c.l.b16 %v114
    %v218 = vunpack.c.h.b16 %v114
    %v219 = vunpack.c.l.b16 %v115
    %v220 = vunpack.c.h.b16 %v115
    %v221 = vunpack.c.l.b16 %v116
    %v222 = vunpack.c.h.b16 %v116
    %v223 = vpack.c.b16 %v163, %v159
    %v224 = vpack.c.b16 %v164, %v160
    %v225 = vpack.c.b16 %v165, %v161
    %v226 = vpack.c.b16 %v166, %v162
    %v227 = vpack.c.b16 %v171, %v167
    %v228 = vpack.c.b16 %v172, %v168
    %v229 = vpack.c.b16 %v173, %v169
    %v230 = vpack.c.b16 %v174, %v170
    %v231 = vpack.c.b16 %v179, %v175
    %v232 = vpack.c.b16 %v180, %v176
    %v233 = vpack.c.b16 %v181, %v177
    %v234 = vpack.c.b16 %v182, %v178
    %v235 = vpack.c.b16 %v187, %v183
    %v236 = vpack.c.b16 %v188, %v184
    %v237 = vpack.c.b16 %v189, %v185
    %v238 = vpack.c.b16 %v190, %v186
    %v239 = vpack.c.b16 %v195, %v191
    %v240 = vpack.c.b16 %v196, %v192
    %v241 = vpack.c.b16 %v197, %v193
    %v242 = vpack.c.b16 %v198, %v194
    %v243 = vpack.c.b16 %v203, %v199
    %v244 = vpack.c.b16 %v204, %v200
    %v245 = vpack.c.b16 %v205, %v201
    %v246 = vpack.c.b16 %v206, %v202
    %v247 = vpack.c.b16 %v211, %v207
    %v248 = vpack.c.b16 %v212, %v208
    %v249 = vpack.c.b16 %v213, %v209
    %v250 = vpack.c.b16 %v214, %v210
    %v251 = vpack.c.b16 %v219, %v215
    %v252 = vpack.c.b16 %v220, %v216
    %v253 = vpack.c.b16 %v221, %v217
    %v254 = vpack.c.b16 %v222, %v218
    %287 = vmatpush.bf16.msra.mxu0 %v251
    %288 = vmatpush.bf16.msra.mxu0 %v247
    %289 = vmatpush.bf16.msra.mxu0 %v243
    %290 = vmatpush.bf16.msra.mxu0 %v239
    %291 = vmatpush.bf16.msra.mxu0 %v235
    %292 = vmatpush.bf16.msra.mxu0 %v231
    %293 = vmatpush.bf16.msra.mxu0 %v227
    %294 = vmatpush.bf16.msra.mxu0 %v223
    %295 = vmatmul.bf16.gmra.mxu0 %v84
    %v296 = vpop.f32.mrf.mxu0
    %v297 = vadd.f32 %v119, %v296
    %v298 = vpop.f32.mrf.mxu0
    %v299 = vadd.f32 %v119, %v298
    %300 = vdwg.mxu0
    %301 = vmatpush.bf16.msra.mxu0 %v252
    %302 = vmatpush.bf16.msra.mxu0 %v248
    %303 = vmatpush.bf16.msra.mxu0 %v244
    %304 = vmatpush.bf16.msra.mxu0 %v240
    %305 = vmatpush.bf16.msra.mxu0 %v236
    %306 = vmatpush.bf16.msra.mxu0 %v232
    %307 = vmatpush.bf16.msra.mxu0 %v228
    %308 = vmatpush.bf16.msra.mxu0 %v224
    %309 = vmatmul.bf16.gmra.mxu0 %v84
    %v310 = vpop.f32.mrf.mxu0
    %v311 = vadd.f32 %v120, %v310
    %v312 = vpop.f32.mrf.mxu0
    %v313 = vadd.f32 %v120, %v312
    %314 = vdwg.mxu0
    %315 = vmatpush.bf16.msra.mxu0 %v253
    %316 = vmatpush.bf16.msra.mxu0 %v249
    %317 = vmatpush.bf16.msra.mxu0 %v245
    %318 = vmatpush.bf16.msra.mxu0 %v241
    %319 = vmatpush.bf16.msra.mxu0 %v237
    %320 = vmatpush.bf16.msra.mxu0 %v233
    %321 = vmatpush.bf16.msra.mxu0 %v229
    %322 = vmatpush.bf16.msra.mxu0 %v225
    %323 = vmatmul.bf16.gmra.mxu0 %v84
    %v324 = vpop.f32.mrf.mxu0
    %v325 = vadd.f32 %v121, %v324
    %v326 = vpop.f32.mrf.mxu0
    %v327 = vadd.f32 %v121, %v326
    %328 = vdwg.mxu0
    %329 = vmatpush.bf16.msra.mxu0 %v254
    %330 = vmatpush.bf16.msra.mxu0 %v250
    %331 = vmatpush.bf16.msra.mxu0 %v246
    %332 = vmatpush.bf16.msra.mxu0 %v242
    %333 = vmatpush.bf16.msra.mxu0 %v238
    %334 = vmatpush.bf16.msra.mxu0 %v234
    %335 = vmatpush.bf16.msra.mxu0 %v230
    %336 = vmatpush.bf16.msra.mxu0 %v226
    %337 = vmatmul.bf16.gmra.mxu0 %v84
    %v338 = vpop.f32.mrf.mxu0
    %v339 = vadd.f32 %v122, %v338
    %v340 = vpop.f32.mrf.mxu0
    %v341 = vadd.f32 %v122, %v340
    %342 = vdwg.mxu0
    %v343 = vmul.f32 %v297, 0.5
    %v344 = vmul.f32 %v311, 0.5
    %v345 = vmul.f32 %v325, 0.5
    %v346 = vmul.f32 %v339, 0.5
    %v347 = vmul.f32 %v299, 0.5
    %v348 = vmul.f32 %v313, 0.5
    %v349 = vmul.f32 %v327, 0.5
    %v350 = vmul.f32 %v341, 0.5
    %v351 = vmul.f32 %v297, 0.70710677
    %v352 = vmul.f32 %v311, 0.70710677
    %v353 = vmul.f32 %v325, 0.70710677
    %v354 = vmul.f32 %v339, 0.70710677
    %v355 = vmul.f32 %v299, 0.70710677
    %v356 = vmul.f32 %v313, 0.70710677
    %v357 = vmul.f32 %v327, 0.70710677
    %v358 = vmul.f32 %v341, 0.70710677
    %v359 = vmul.f32 %v351, %v351
    %v360 = vmin.f32 16.0, %v359
    %v361 = vmul.f32 %v360, 2.1237322e-06
    %v362 = vadd.f32 %v361, 0.00028619796
    %v363 = vmul.f32 %v360, %v362
    %v364 = vadd.f32 %v363, 0.0036580483
    %v365 = vmul.f32 %v360, %v364
    %v366 = vadd.f32 %v365, 0.05243302
    %v367 = vmul.f32 %v360, %v366
    %v368 = vadd.f32 %v367, 0.18741608
    %v369 = vmul.f32 %v360, %v368
    %v370 = vadd.f32 %v369, 1.1283791
    %v371 = vmul.f32 %v351, %v370
    %v372 = vmul.f32 %v360, 3.8918573e-05
    %v373 = vadd.f32 %v372, 0.001143296
    %v374 = vmul.f32 %v360, %v373
    %v375 = vadd.f32 %v374, 0.014752088
    %v376 = vmul.f32 %v360, %v375
    %v377 = vadd.f32 %v376, 0.112945676
    %v378 = vmul.f32 %v360, %v377
    %v379 = vadd.f32 %v378, 0.4994258
    %v380 = vmul.f32 %v360, %v379
    %v381 = vadd.f32 %v380, 1.0
    %v382 = vrcp.pop %v381
    %v383 = vmul.f32 %v381, %v382
    %v384 = vsub.f32 1.0, %v383
    %v385 = vmul.f32 %v382, %v384
    %v386 = vadd.f32 %v382, %v385
    %vm387 = vweird.f32 %v381
    %vm388 = vweird.f32 %v382
    %vm389 = vmor %vm387, %vm388
    %v390 = vsel %vm389, %v382, %v386
    %v391 = vand.u32 2147483647, %v381
    %vm392 = vcmp.eq.f32.partialorder %v391, 8.507059e+37
    %v393 = vand.u32 %v381, 2147483648
    %v394 = vor.u32 1.1754944e-38, %v393
    %v395 = vsel %vm392, %v394, %v390
    %v396 = vmul.f32 %v371, %v395
    %v397 = vmin.f32 %v396, 1.0
    %v398 = vmax.f32 %v397, -1.0
    %v399 = vmul.f32 %v352, %v352
    %v400 = vmin.f32 16.0, %v399
    %v401 = vmul.f32 %v400, 2.1237322e-06
    %v402 = vadd.f32 %v401, 0.00028619796
    %v403 = vmul.f32 %v400, %v402
    %v404 = vadd.f32 %v403, 0.0036580483
    %v405 = vmul.f32 %v400, %v404
    %v406 = vadd.f32 %v405, 0.05243302
    %v407 = vmul.f32 %v400, %v406
    %v408 = vadd.f32 %v407, 0.18741608
    %v409 = vmul.f32 %v400, %v408
    %v410 = vadd.f32 %v409, 1.1283791
    %v411 = vmul.f32 %v352, %v410
    %v412 = vmul.f32 %v400, 3.8918573e-05
    %v413 = vadd.f32 %v412, 0.001143296
    %v414 = vmul.f32 %v400, %v413
    %v415 = vadd.f32 %v414, 0.014752088
    %v416 = vmul.f32 %v400, %v415
    %v417 = vadd.f32 %v416, 0.112945676
    %v418 = vmul.f32 %v400, %v417
    %v419 = vadd.f32 %v418, 0.4994258
    %v420 = vmul.f32 %v400, %v419
    %v421 = vadd.f32 %v420, 1.0
    %v422 = vrcp.pop %v421
    %v423 = vmul.f32 %v421, %v422
    %v424 = vsub.f32 1.0, %v423
    %v425 = vmul.f32 %v422, %v424
    %v426 = vadd.f32 %v422, %v425
    %vm427 = vweird.f32 %v421
    %vm428 = vweird.f32 %v422
    %vm429 = vmor %vm427, %vm428
    %v430 = vsel %vm429, %v422, %v426
    %v431 = vand.u32 2147483647, %v421
    %vm432 = vcmp.eq.f32.partialorder %v431, 8.507059e+37
    %v433 = vand.u32 %v421, 2147483648
    %v434 = vor.u32 1.1754944e-38, %v433
    %v435 = vsel %vm432, %v434, %v430
    %v436 = vmul.f32 %v411, %v435
    %v437 = vmin.f32 %v436, 1.0
    %v438 = vmax.f32 %v437, -1.0
    %v439 = vmul.f32 %v353, %v353
    %v440 = vmin.f32 16.0, %v439
    %v441 = vmul.f32 %v440, 2.1237322e-06
    %v442 = vadd.f32 %v441, 0.00028619796
    %v443 = vmul.f32 %v440, %v442
    %v444 = vadd.f32 %v443, 0.0036580483
    %v445 = vmul.f32 %v440, %v444
    %v446 = vadd.f32 %v445, 0.05243302
    %v447 = vmul.f32 %v440, %v446
    %v448 = vadd.f32 %v447, 0.18741608
    %v449 = vmul.f32 %v440, %v448
    %v450 = vadd.f32 %v449, 1.1283791
    %v451 = vmul.f32 %v353, %v450
    %v452 = vmul.f32 %v440, 3.8918573e-05
    %v453 = vadd.f32 %v452, 0.001143296
    %v454 = vmul.f32 %v440, %v453
    %v455 = vadd.f32 %v454, 0.014752088
    %v456 = vmul.f32 %v440, %v455
    %v457 = vadd.f32 %v456, 0.112945676
    %v458 = vmul.f32 %v440, %v457
    %v459 = vadd.f32 %v458, 0.4994258
    %v460 = vmul.f32 %v440, %v459
    %v461 = vadd.f32 %v460, 1.0
    %v462 = vrcp.pop %v461
    %v463 = vmul.f32 %v461, %v462
    %v464 = vsub.f32 1.0, %v463
    %v465 = vmul.f32 %v462, %v464
    %v466 = vadd.f32 %v462, %v465
    %vm467 = vweird.f32 %v461
    %vm468 = vweird.f32 %v462
    %vm469 = vmor %vm467, %vm468
    %v470 = vsel %vm469, %v462, %v466
    %v471 = vand.u32 2147483647, %v461
    %vm472 = vcmp.eq.f32.partialorder %v471, 8.507059e+37
    %v473 = vand.u32 %v461, 2147483648
    %v474 = vor.u32 1.1754944e-38, %v473
    %v475 = vsel %vm472, %v474, %v470
    %v476 = vmul.f32 %v451, %v475
    %v477 = vmin.f32 %v476, 1.0
    %v478 = vmax.f32 %v477, -1.0
    %v479 = vmul.f32 %v354, %v354
    %v480 = vmin.f32 16.0, %v479
    %v481 = vmul.f32 %v480, 2.1237322e-06
    %v482 = vadd.f32 %v481, 0.00028619796
    %v483 = vmul.f32 %v480, %v482
    %v484 = vadd.f32 %v483, 0.0036580483
    %v485 = vmul.f32 %v480, %v484
    %v486 = vadd.f32 %v485, 0.05243302
    %v487 = vmul.f32 %v480, %v486
    %v488 = vadd.f32 %v487, 0.18741608
    %v489 = vmul.f32 %v480, %v488
    %v490 = vadd.f32 %v489, 1.1283791
    %v491 = vmul.f32 %v354, %v490
    %v492 = vmul.f32 %v480, 3.8918573e-05
    %v493 = vadd.f32 %v492, 0.001143296
    %v494 = vmul.f32 %v480, %v493
    %v495 = vadd.f32 %v494, 0.014752088
    %v496 = vmul.f32 %v480, %v495
    %v497 = vadd.f32 %v496, 0.112945676
    %v498 = vmul.f32 %v480, %v497
    %v499 = vadd.f32 %v498, 0.4994258
    %v500 = vmul.f32 %v480, %v499
    %v501 = vadd.f32 %v500, 1.0
    %v502 = vrcp.pop %v501
    %v503 = vmul.f32 %v501, %v502
    %v504 = vsub.f32 1.0, %v503
    %v505 = vmul.f32 %v502, %v504
    %v506 = vadd.f32 %v502, %v505
    %vm507 = vweird.f32 %v501
    %vm508 = vweird.f32 %v502
    %vm509 = vmor %vm507, %vm508
    %v510 = vsel %vm509, %v502, %v506
    %v511 = vand.u32 2147483647, %v501
    %vm512 = vcmp.eq.f32.partialorder %v511, 8.507059e+37
    %v513 = vand.u32 %v501, 2147483648
    %v514 = vor.u32 1.1754944e-38, %v513
    %v515 = vsel %vm512, %v514, %v510
    %v516 = vmul.f32 %v491, %v515
    %v517 = vmin.f32 %v516, 1.0
    %v518 = vmax.f32 %v517, -1.0
    %v519 = vmul.f32 %v355, %v355
    %v520 = vmin.f32 16.0, %v519
    %v521 = vmul.f32 %v520, 2.1237322e-06
    %v522 = vadd.f32 %v521, 0.00028619796
    %v523 = vmul.f32 %v520, %v522
    %v524 = vadd.f32 %v523, 0.0036580483
    %v525 = vmul.f32 %v520, %v524
    %v526 = vadd.f32 %v525, 0.05243302
    %v527 = vmul.f32 %v520, %v526
    %v528 = vadd.f32 %v527, 0.18741608
    %v529 = vmul.f32 %v520, %v528
    %v530 = vadd.f32 %v529, 1.1283791
    %v531 = vmul.f32 %v355, %v530
    %v532 = vmul.f32 %v520, 3.8918573e-05
    %v533 = vadd.f32 %v532, 0.001143296
    %v534 = vmul.f32 %v520, %v533
    %v535 = vadd.f32 %v534, 0.014752088
    %v536 = vmul.f32 %v520, %v535
    %v537 = vadd.f32 %v536, 0.112945676
    %v538 = vmul.f32 %v520, %v537
    %v539 = vadd.f32 %v538, 0.4994258
    %v540 = vmul.f32 %v520, %v539
    %v541 = vadd.f32 %v540, 1.0
    %v542 = vrcp.pop %v541
    %v543 = vmul.f32 %v541, %v542
    %v544 = vsub.f32 1.0, %v543
    %v545 = vmul.f32 %v542, %v544
    %v546 = vadd.f32 %v542, %v545
    %vm547 = vweird.f32 %v541
    %vm548 = vweird.f32 %v542
    %vm549 = vmor %vm547, %vm548
    %v550 = vsel %vm549, %v542, %v546
    %v551 = vand.u32 2147483647, %v541
    %vm552 = vcmp.eq.f32.partialorder %v551, 8.507059e+37
    %v553 = vand.u32 %v541, 2147483648
    %v554 = vor.u32 1.1754944e-38, %v553
    %v555 = vsel %vm552, %v554, %v550
    %v556 = vmul.f32 %v531, %v555
    %v557 = vmin.f32 %v556, 1.0
    %v558 = vmax.f32 %v557, -1.0
    %v559 = vmul.f32 %v356, %v356
    %v560 = vmin.f32 16.0, %v559
    %v561 = vmul.f32 %v560, 2.1237322e-06
    %v562 = vadd.f32 %v561, 0.00028619796
    %v563 = vmul.f32 %v560, %v562
    %v564 = vadd.f32 %v563, 0.0036580483
    %v565 = vmul.f32 %v560, %v564
    %v566 = vadd.f32 %v565, 0.05243302
    %v567 = vmul.f32 %v560, %v566
    %v568 = vadd.f32 %v567, 0.18741608
    %v569 = vmul.f32 %v560, %v568
    %v570 = vadd.f32 %v569, 1.1283791
    %v571 = vmul.f32 %v356, %v570
    %v572 = vmul.f32 %v560, 3.8918573e-05
    %v573 = vadd.f32 %v572, 0.001143296
    %v574 = vmul.f32 %v560, %v573
    %v575 = vadd.f32 %v574, 0.014752088
    %v576 = vmul.f32 %v560, %v575
    %v577 = vadd.f32 %v576, 0.112945676
    %v578 = vmul.f32 %v560, %v577
    %v579 = vadd.f32 %v578, 0.4994258
    %v580 = vmul.f32 %v560, %v579
    %v581 = vadd.f32 %v580, 1.0
    %v582 = vrcp.pop %v581
    %v583 = vmul.f32 %v581, %v582
    %v584 = vsub.f32 1.0, %v583
    %v585 = vmul.f32 %v582, %v584
    %v586 = vadd.f32 %v582, %v585
    %vm587 = vweird.f32 %v581
    %vm588 = vweird.f32 %v582
    %vm589 = vmor %vm587, %vm588
    %v590 = vsel %vm589, %v582, %v586
    %v591 = vand.u32 2147483647, %v581
    %vm592 = vcmp.eq.f32.partialorder %v591, 8.507059e+37
    %v593 = vand.u32 %v581, 2147483648
    %v594 = vor.u32 1.1754944e-38, %v593
    %v595 = vsel %vm592, %v594, %v590
    %v596 = vmul.f32 %v571, %v595
    %v597 = vmin.f32 %v596, 1.0
    %v598 = vmax.f32 %v597, -1.0
    %v599 = vmul.f32 %v357, %v357
    %v600 = vmin.f32 16.0, %v599
    %v601 = vmul.f32 %v600, 2.1237322e-06
    %v602 = vadd.f32 %v601, 0.00028619796
    %v603 = vmul.f32 %v600, %v602
    %v604 = vadd.f32 %v603, 0.0036580483
    %v605 = vmul.f32 %v600, %v604
    %v606 = vadd.f32 %v605, 0.05243302
    %v607 = vmul.f32 %v600, %v606
    %v608 = vadd.f32 %v607, 0.18741608
    %v609 = vmul.f32 %v600, %v608
    %v610 = vadd.f32 %v609, 1.1283791
    %v611 = vmul.f32 %v357, %v610
    %v612 = vmul.f32 %v600, 3.8918573e-05
    %v613 = vadd.f32 %v612, 0.001143296
    %v614 = vmul.f32 %v600, %v613
    %v615 = vadd.f32 %v614, 0.014752088
    %v616 = vmul.f32 %v600, %v615
    %v617 = vadd.f32 %v616, 0.112945676
    %v618 = vmul.f32 %v600, %v617
    %v619 = vadd.f32 %v618, 0.4994258
    %v620 = vmul.f32 %v600, %v619
    %v621 = vadd.f32 %v620, 1.0
    %v622 = vrcp.pop %v621
    %v623 = vmul.f32 %v621, %v622
    %v624 = vsub.f32 1.0, %v623
    %v625 = vmul.f32 %v622, %v624
    %v626 = vadd.f32 %v622, %v625
    %vm627 = vweird.f32 %v621
    %vm628 = vweird.f32 %v622
    %vm629 = vmor %vm627, %vm628
    %v630 = vsel %vm629, %v622, %v626
    %v631 = vand.u32 2147483647, %v621
    %vm632 = vcmp.eq.f32.partialorder %v631, 8.507059e+37
    %v633 = vand.u32 %v621, 2147483648
    %v634 = vor.u32 1.1754944e-38, %v633
    %v635 = vsel %vm632, %v634, %v630
    %v636 = vmul.f32 %v611, %v635
    %v637 = vmin.f32 %v636, 1.0
    %v638 = vmax.f32 %v637, -1.0
    %v639 = vmul.f32 %v358, %v358
    %v640 = vmin.f32 16.0, %v639
    %v641 = vmul.f32 %v640, 2.1237322e-06
    %v642 = vadd.f32 %v641, 0.00028619796
    %v643 = vmul.f32 %v640, %v642
    %v644 = vadd.f32 %v643, 0.0036580483
    %v645 = vmul.f32 %v640, %v644
    %v646 = vadd.f32 %v645, 0.05243302
    %v647 = vmul.f32 %v640, %v646
    %v648 = vadd.f32 %v647, 0.18741608
    %v649 = vmul.f32 %v640, %v648
    %v650 = vadd.f32 %v649, 1.1283791
    %v651 = vmul.f32 %v358, %v650
    %v652 = vmul.f32 %v640, 3.8918573e-05
    %v653 = vadd.f32 %v652, 0.001143296
    %v654 = vmul.f32 %v640, %v653
    %v655 = vadd.f32 %v654, 0.014752088
    %v656 = vmul.f32 %v640, %v655
    %v657 = vadd.f32 %v656, 0.112945676
    %v658 = vmul.f32 %v640, %v657
    %v659 = vadd.f32 %v658, 0.4994258
    %v660 = vmul.f32 %v640, %v659
    %v661 = vadd.f32 %v660, 1.0
    %v662 = vrcp.pop %v661
    %v663 = vmul.f32 %v661, %v662
    %v664 = vsub.f32 1.0, %v663
    %v665 = vmul.f32 %v662, %v664
    %v666 = vadd.f32 %v662, %v665
    %vm667 = vweird.f32 %v661
    %vm668 = vweird.f32 %v662
    %vm669 = vmor %vm667, %vm668
    %v670 = vsel %vm669, %v662, %v666
    %v671 = vand.u32 2147483647, %v661
    %vm672 = vcmp.eq.f32.partialorder %v671, 8.507059e+37
    %v673 = vand.u32 %v661, 2147483648
    %v674 = vor.u32 1.1754944e-38, %v673
    %v675 = vsel %vm672, %v674, %v670
    %v676 = vmul.f32 %v651, %v675
    %v677 = vmin.f32 %v676, 1.0
    %v678 = vmax.f32 %v677, -1.0
    %v679 = vadd.f32 %v398, 1.0
    %v680 = vadd.f32 %v438, 1.0
    %v681 = vadd.f32 %v478, 1.0
    %v682 = vadd.f32 %v518, 1.0
    %v683 = vadd.f32 %v558, 1.0
    %v684 = vadd.f32 %v598, 1.0
    %v685 = vadd.f32 %v638, 1.0
    %v686 = vadd.f32 %v678, 1.0
    %v687 = vmul.f32 %v343, %v679
    %v688 = vmul.f32 %v344, %v680
    %v689 = vmul.f32 %v345, %v681
    %v690 = vmul.f32 %v346, %v682
    %v691 = vmul.f32 %v347, %v683
    %v692 = vmul.f32 %v348, %v684
    %v693 = vmul.f32 %v349, %v685
    %v694 = vmul.f32 %v350, %v686
    %v695 = vpack.c.bf16 %v691, %v687
    %v696 = vpack.c.bf16 %v692, %v688
    %v697 = vpack.c.bf16 %v693, %v689
    %v698 = vpack.c.bf16 %v694, %v690
    %v699 = vld [vmem:[#allocation8] sm:$0xf]
    %v700 = vld [vmem:[#allocation8 + $0x4] sm:$0xf]
    %v701 = vld [vmem:[#allocation8 + $0x8] sm:$0xf]
    %v702 = vld [vmem:[#allocation8 + $0xc] sm:$0xf]
    %v703 = vld [vmem:[#allocation8 + $0x10] sm:$0xf]
    %v704 = vld [vmem:[#allocation8 + $0x14] sm:$0xf]
    %v705 = vld [vmem:[#allocation8 + $0x18] sm:$0xf]
    %v706 = vld [vmem:[#allocation8 + $0x1c] sm:$0xf]
    %v707 = vld [vmem:[#allocation8 + $0x20] sm:$0xf]
    %v708 = vld [vmem:[#allocation8 + $0x24] sm:$0xf]
    %v709 = vld [vmem:[#allocation8 + $0x28] sm:$0xf]
    %v710 = vld [vmem:[#allocation8 + $0x2c] sm:$0xf]
    %v711 = vld [vmem:[#allocation8 + $0x30] sm:$0xf]
    %v712 = vld [vmem:[#allocation8 + $0x34] sm:$0xf]
    %v713 = vld [vmem:[#allocation8 + $0x38] sm:$0xf]
    %v714 = vld [vmem:[#allocation8 + $0x3c] sm:$0xf]
    %v715 = vld [vmem:[#allocation8 + $0x40] sm:$0xf]
    %v716 = vld [vmem:[#allocation8 + $0x44] sm:$0xf]
    %v717 = vld [vmem:[#allocation8 + $0x48] sm:$0xf]
    %v718 = vld [vmem:[#allocation8 + $0x4c] sm:$0xf]
    %v719 = vld [vmem:[#allocation8 + $0x50] sm:$0xf]
    %v720 = vld [vmem:[#allocation8 + $0x54] sm:$0xf]
    %v721 = vld [vmem:[#allocation8 + $0x58] sm:$0xf]
    %v722 = vld [vmem:[#allocation8 + $0x5c] sm:$0xf]
    %v723 = vld [vmem:[#allocation8 + $0x60] sm:$0xf]
    %v724 = vld [vmem:[#allocation8 + $0x64] sm:$0xf]
    %v725 = vld [vmem:[#allocation8 + $0x68] sm:$0xf]
    %v726 = vld [vmem:[#allocation8 + $0x6c] sm:$0xf]
    %v727 = vld [vmem:[#allocation8 + $0x70] sm:$0xf]
    %v728 = vld [vmem:[#allocation8 + $0x74] sm:$0xf]
    %v729 = vld [vmem:[#allocation8 + $0x78] sm:$0xf]
    %v730 = vld [vmem:[#allocation8 + $0x7c] sm:$0xf]
    %v731 = vld [vmem:[#allocation8 + $0x80] sm:$0xf]
    %v732 = vld [vmem:[#allocation8 + $0x84] sm:$0xf]
    %v733 = vld [vmem:[#allocation8 + $0x88] sm:$0xf]
    %v734 = vld [vmem:[#allocation8 + $0x8c] sm:$0xf]
    %v735 = vld [vmem:[#allocation8 + $0x90] sm:$0xf]
    %v736 = vld [vmem:[#allocation8 + $0x94] sm:$0xf]
    %v737 = vld [vmem:[#allocation8 + $0x98] sm:$0xf]
    %v738 = vld [vmem:[#allocation8 + $0x9c] sm:$0xf]
    %v739 = vld [vmem:[#allocation8 + $0xa0] sm:$0xf]
    %v740 = vld [vmem:[#allocation8 + $0xa4] sm:$0xf]
    %v741 = vld [vmem:[#allocation8 + $0xa8] sm:$0xf]
    %v742 = vld [vmem:[#allocation8 + $0xac] sm:$0xf]
    %v743 = vld [vmem:[#allocation8 + $0xb0] sm:$0xf]
    %v744 = vld [vmem:[#allocation8 + $0xb4] sm:$0xf]
    %v745 = vld [vmem:[#allocation8 + $0xb8] sm:$0xf]
    %v746 = vld [vmem:[#allocation8 + $0xbc] sm:$0xf]
    %v747 = vld [vmem:[#allocation8 + $0xc0] sm:$0xf]
    %v748 = vld [vmem:[#allocation8 + $0xc4] sm:$0xf]
    %v749 = vld [vmem:[#allocation8 + $0xc8] sm:$0xf]
    %v750 = vld [vmem:[#allocation8 + $0xcc] sm:$0xf]
    %v751 = vld [vmem:[#allocation8 + $0xd0] sm:$0xf]
    %v752 = vld [vmem:[#allocation8 + $0xd4] sm:$0xf]
    %v753 = vld [vmem:[#allocation8 + $0xd8] sm:$0xf]
    %v754 = vld [vmem:[#allocation8 + $0xdc] sm:$0xf]
    %v755 = vld [vmem:[#allocation8 + $0xe0] sm:$0xf]
    %v756 = vld [vmem:[#allocation8 + $0xe4] sm:$0xf]
    %v757 = vld [vmem:[#allocation8 + $0xe8] sm:$0xf]
    %v758 = vld [vmem:[#allocation8 + $0xec] sm:$0xf]
    %v759 = vld [vmem:[#allocation8 + $0xf0] sm:$0xf]
    %v760 = vld [vmem:[#allocation8 + $0xf4] sm:$0xf]
    %v761 = vld [vmem:[#allocation8 + $0xf8] sm:$0xf]
    %v762 = vld [vmem:[#allocation8 + $0xfc] sm:$0xf]
    %v763 = vld [vmem:[%s4] sm:$0x1]
    %v765 = vperm.slane %v763, 0
    %v831 = vunpack.c.l.b16 %v699
    %v832 = vunpack.c.l.b16 %v700
    %v833 = vunpack.c.l.b16 %v701
    %v834 = vunpack.c.l.b16 %v702
    %v835 = vunpack.c.l.b16 %v703
    %v836 = vunpack.c.l.b16 %v704
    %v837 = vunpack.c.l.b16 %v705
    %v838 = vunpack.c.l.b16 %v706
    %v839 = vunpack.c.l.b16 %v707
    %v840 = vunpack.c.l.b16 %v708
    %v841 = vunpack.c.l.b16 %v709
    %v842 = vunpack.c.l.b16 %v710
    %v843 = vunpack.c.l.b16 %v711
    %v844 = vunpack.c.l.b16 %v712
    %v845 = vunpack.c.l.b16 %v713
    %v846 = vunpack.c.l.b16 %v714
    %v847 = vunpack.c.l.b16 %v715
    %v848 = vunpack.c.l.b16 %v716
    %v849 = vunpack.c.l.b16 %v717
    %v850 = vunpack.c.l.b16 %v718
    %v851 = vunpack.c.l.b16 %v719
    %v852 = vunpack.c.l.b16 %v720
    %v853 = vunpack.c.l.b16 %v721
    %v854 = vunpack.c.l.b16 %v722
    %v855 = vunpack.c.l.b16 %v723
    %v856 = vunpack.c.l.b16 %v724
    %v857 = vunpack.c.l.b16 %v725
    %v858 = vunpack.c.l.b16 %v726
    %v859 = vunpack.c.l.b16 %v727
    %v860 = vunpack.c.l.b16 %v728
    %v861 = vunpack.c.l.b16 %v729
    %v862 = vunpack.c.l.b16 %v730
    %v863 = vunpack.c.l.b16 %v731
    %v864 = vunpack.c.l.b16 %v732
    %v865 = vunpack.c.l.b16 %v733
    %v866 = vunpack.c.l.b16 %v734
    %v867 = vunpack.c.l.b16 %v735
    %v868 = vunpack.c.l.b16 %v736
    %v869 = vunpack.c.l.b16 %v737
    %v870 = vunpack.c.l.b16 %v738
    %v871 = vunpack.c.l.b16 %v739
    %v872 = vunpack.c.l.b16 %v740
    %v873 = vunpack.c.l.b16 %v741
    %v874 = vunpack.c.l.b16 %v742
    %v875 = vunpack.c.l.b16 %v743
    %v876 = vunpack.c.l.b16 %v744
    %v877 = vunpack.c.l.b16 %v745
    %v878 = vunpack.c.l.b16 %v746
    %v879 = vunpack.c.l.b16 %v747
    %v880 = vunpack.c.l.b16 %v748
    %v881 = vunpack.c.l.b16 %v749
    %v882 = vunpack.c.l.b16 %v750
    %v883 = vunpack.c.l.b16 %v751
    %v884 = vunpack.c.l.b16 %v752
    %v885 = vunpack.c.l.b16 %v753
    %v886 = vunpack.c.l.b16 %v754
    %v887 = vunpack.c.l.b16 %v755
    %v888 = vunpack.c.l.b16 %v756
    %v889 = vunpack.c.l.b16 %v757
    %v890 = vunpack.c.l.b16 %v758
    %v891 = vunpack.c.l.b16 %v759
    %v892 = vunpack.c.l.b16 %v760
    %v893 = vunpack.c.l.b16 %v761
    %v894 = vunpack.c.l.b16 %v762
    %v895 = vpack.c.b16 %v832, %v831
    %v896 = vpack.c.b16 %v834, %v833
    %v897 = vpack.c.b16 %v836, %v835
    %v898 = vpack.c.b16 %v838, %v837
    %v899 = vpack.c.b16 %v840, %v839
    %v900 = vpack.c.b16 %v842, %v841
    %v901 = vpack.c.b16 %v844, %v843
    %v902 = vpack.c.b16 %v846, %v845
    %v903 = vpack.c.b16 %v848, %v847
    %v904 = vpack.c.b16 %v850, %v849
    %v905 = vpack.c.b16 %v852, %v851
    %v906 = vpack.c.b16 %v854, %v853
    %v907 = vpack.c.b16 %v856, %v855
    %v908 = vpack.c.b16 %v858, %v857
    %v909 = vpack.c.b16 %v860, %v859
    %v910 = vpack.c.b16 %v862, %v861
    %v911 = vpack.c.b16 %v864, %v863
    %v912 = vpack.c.b16 %v866, %v865
    %v913 = vpack.c.b16 %v868, %v867
    %v914 = vpack.c.b16 %v870, %v869
    %v915 = vpack.c.b16 %v872, %v871
    %v916 = vpack.c.b16 %v874, %v873
    %v917 = vpack.c.b16 %v876, %v875
    %v918 = vpack.c.b16 %v878, %v877
    %v919 = vpack.c.b16 %v880, %v879
    %v920 = vpack.c.b16 %v882, %v881
    %v921 = vpack.c.b16 %v884, %v883
    %v922 = vpack.c.b16 %v886, %v885
    %v923 = vpack.c.b16 %v888, %v887
    %v924 = vpack.c.b16 %v890, %v889
    %v925 = vpack.c.b16 %v892, %v891
    %v926 = vpack.c.b16 %v894, %v893
    %959 = vmatpush.bf16.msra.mxu0 %v902
    %960 = vmatpush.bf16.msra.mxu0 %v901
    %961 = vmatpush.bf16.msra.mxu0 %v900
    %962 = vmatpush.bf16.msra.mxu0 %v899
    %963 = vmatpush.bf16.msra.mxu0 %v898
    %964 = vmatpush.bf16.msra.mxu0 %v897
    %965 = vmatpush.bf16.msra.mxu0 %v896
    %966 = vmatpush.bf16.msra.mxu0 %v895
    %967 = vmatmul.bf16.gmra.mxu0 %v695
    %v968 = vpop.f32.mrf.mxu0
    %v969 = vadd.f32 %v765, %v968
    %v970 = vpop.f32.mrf.mxu0
    %v971 = vadd.f32 %v765, %v970
    %972 = vdwg.mxu0
    %973 = vmatpush.bf16.msra.mxu0 %v910
    %974 = vmatpush.bf16.msra.mxu0 %v909
    %975 = vmatpush.bf16.msra.mxu0 %v908
    %976 = vmatpush.bf16.msra.mxu0 %v907
    %977 = vmatpush.bf16.msra.mxu0 %v906
    %978 = vmatpush.bf16.msra.mxu0 %v905
    %979 = vmatpush.bf16.msra.mxu0 %v904
    %980 = vmatpush.bf16.msra.mxu0 %v903
    %981 = vmatmul.bf16.gmra.mxu0 %v696
    %v982 = vpop.f32.mrf.mxu0
    %v983 = vadd.f32 %v969, %v982
    %v984 = vpop.f32.mrf.mxu0
    %v985 = vadd.f32 %v971, %v984
    %986 = vdwg.mxu0
    %987 = vmatpush.bf16.msra.mxu0 %v918
    %988 = vmatpush.bf16.msra.mxu0 %v917
    %989 = vmatpush.bf16.msra.mxu0 %v916
    %990 = vmatpush.bf16.msra.mxu0 %v915
    %991 = vmatpush.bf16.msra.mxu0 %v914
    %992 = vmatpush.bf16.msra.mxu0 %v913
    %993 = vmatpush.bf16.msra.mxu0 %v912
    %994 = vmatpush.bf16.msra.mxu0 %v911
    %995 = vmatmul.bf16.gmra.mxu0 %v697
    %v996 = vpop.f32.mrf.mxu0
    %v997 = vadd.f32 %v983, %v996
    %v998 = vpop.f32.mrf.mxu0
    %v999 = vadd.f32 %v985, %v998
    %1000 = vdwg.mxu0
    %1001 = vmatpush.bf16.msra.mxu0 %v926
    %1002 = vmatpush.bf16.msra.mxu0 %v925
    %1003 = vmatpush.bf16.msra.mxu0 %v924
    %1004 = vmatpush.bf16.msra.mxu0 %v923
    %1005 = vmatpush.bf16.msra.mxu0 %v922
    %1006 = vmatpush.bf16.msra.mxu0 %v921
    %1007 = vmatpush.bf16.msra.mxu0 %v920
    %1008 = vmatpush.bf16.msra.mxu0 %v919
    %1009 = vmatmul.bf16.gmra.mxu0 %v698
    %v1010 = vpop.f32.mrf.mxu0
    %v1011 = vadd.f32 %v997, %v1010
    %v1012 = vpop.f32.mrf.mxu0
    %v1013 = vadd.f32 %v999, %v1012
    %1014 = vdwg.mxu0
    %1015 = vst [vmem:[#allocation10] sm:$0xff] %v1011
    %1016 = vst [vmem:[#allocation10 + $0x8] sm:$0xff] %v1013
    // Predicated region
    $region38: #{tpu_custom_call.1} parent=1 // pred_check
      _
    $region39: #{tpu_custom_call.1} parent=1 // pred_check_branch
      %1018 = sbr.rel (0) target = $region41
    $region40: #{tpu_custom_call.1} parent=1 // pred_region
      %1020 = vsyncadd [#allocation4], 0
      %s1021 = sshll.u32 [#allocation10], 4
      %s1022 = int_to_ptr.vmem [resolvable:$true] %s1021
      %s1023 = sshll.u32 %s5, 4
      %s1024 = int_to_ptr.hbm [resolvable:$true] %s1023
      %1029 = dma.vmem_to_hbm [thread:$0]  %s1022, 256, %s1024, [#allocation4], 128, 128, 8
    $region41: #{tpu_custom_call.1} parent=1 // pred_fallthru
      _
    // Predicated region
    $region42: #{tpu_custom_call.1} parent=1 // pred_check
      _
    $region43: #{tpu_custom_call.1} parent=1 // pred_check_branch
      %1031 = sbr.rel (0) target = $region45
    $region44: #{tpu_custom_call.1} parent=1 // pred_region
      %1033 = dma.done [#allocation4], 256
    $region45: #{tpu_custom_call.1} parent=1 // pred_fallthru
      _
    %1034 = vsyncpa [#allocation3], 1
    %1035 = vsyncpa [#allocation6], 1
    %1036 = vsyncpa [#allocation9], 1
    %1037 = vsyncpa [#allocation4], 1

</llo_original>
